<compile_context>
chip_gen: v6e
topology: v6e:2x2x1
jax: 0.10.0
libtpu: 0.0.40
codegen_flags: <defaults>
</compile_context>

<pallas_src>
import jax
import jax.numpy as jnp
from jax import lax
from jax.experimental import pallas as pl
from jax.experimental.pallas import tpu as pltpu


def _bilstm_fc_kernel(x_ref, wih_ref, whh_ref, b_ref, fcw_ref, fcb_ref, out_ref,
                      hf_ref, hr_ref):
    T, B, _ = x_ref.shape
    G = whh_ref.shape[0]            # G = 2H  (both directions, one gate block)
    H = G // 2
    O = fcw_ref.shape[1]

    # ---- phase 1: input projection for BOTH directions in one matmul ----
    # x_ref rows are [x_t | x_{T-1-t}] along the 2I feature axis; wih_ref is the
    # block-structured (2I, 8H) weight with interleaved gate columns
    # [i_f,i_r,f_f,f_r,g_f,g_r,o_f,o_r].  Bias is added exactly once here.
    x_flat = x_ref[...].reshape(T * B, x_ref.shape[2])
    gx = (jnp.dot(x_flat, wih_ref[...], preferred_element_type=jnp.float32)
          + b_ref[...])                                          # (T*B, 8H)

    # ---- phase 2: fused fwd/rev recurrence, fully unrolled (T static) ----
    whh = whh_ref[...]                                           # (2H, 8H) block-diag
    h_cat = jnp.zeros((B, G), jnp.float32)                       # [h_f | h_r]
    c_cat = jnp.zeros((B, G), jnp.float32)                       # [c_f | c_r]
    for t in range(T):
        gates = gx[t * B:(t + 1) * B] + jnp.dot(
            h_cat, whh, preferred_element_type=jnp.float32)      # (B, 8H)
        i_g = jax.nn.sigmoid(gates[:, 0 * G:1 * G])
        f_g = jax.nn.sigmoid(gates[:, 1 * G:2 * G])
        g_g = jnp.tanh(gates[:, 2 * G:3 * G])
        o_g = jax.nn.sigmoid(gates[:, 3 * G:4 * G])
        c_cat = f_g * c_cat + i_g * g_g
        h_cat = o_g * jnp.tanh(c_cat)
        hf_ref[t] = h_cat[:, :H]                   # fwd hidden for time t
        hr_ref[T - 1 - t] = h_cat[:, H:]           # rev hidden for time T-1-t

    # ---- phase 3: FC head hoisted out of the loop (two matmuls total) ----
    hf = hf_ref[...].reshape(T * B, H)
    hr = hr_ref[...].reshape(T * B, H)
    y = (jnp.dot(hf, fcw_ref[:H, :], preferred_element_type=jnp.float32)
         + jnp.dot(hr, fcw_ref[H:, :], preferred_element_type=jnp.float32)
         + fcb_ref[...])
    out_ref[...] = y.reshape(T, B, O).astype(out_ref.dtype)


def _interleave_gates(wf, wr):
    """(rows, 4H) fwd + (rows, 4H) rev (PyTorch [i,f,g,o] order) ->
    (rows, 8H) with column blocks [i_f,i_r,f_f,f_r,g_f,g_r,o_f,o_r]."""
    rows, four_h = wf.shape
    H = four_h // 4
    w = jnp.stack([wf.reshape(rows, 4, H), wr.reshape(rows, 4, H)], axis=2)
    return w.reshape(rows, 8 * H)


def _fuse_params(params):
    """Build the fused / block-diagonal weights consumed by the kernel."""
    zi = jnp.zeros_like(params["wih_f"])
    zh = jnp.zeros_like(params["whh_f"])
    wih_cat = jnp.concatenate(
        [_interleave_gates(params["wih_f"], zi),       # rows for x_t
         _interleave_gates(zi, params["wih_r"])],      # rows for x_{T-1-t}
        axis=0)                                        # (2I, 8H)
    whh_blk = jnp.concatenate(
        [_interleave_gates(params["whh_f"], zh),       # rows for h_f
         _interleave_gates(zh, params["whh_r"])],      # rows for h_r
        axis=0)                                        # (2H, 8H)
    b_cat = _interleave_gates(params["b_f"], params["b_r"])   # (1, 8H)
    return wih_cat, whh_blk, b_cat


def bilstm_fc(x, params):
    T, B, I = x.shape
    H = params["whh_f"].shape[0]
    O = params["fcw"].shape[1]

    wih_cat, whh_blk, b_cat = _fuse_params(params)
    # Time-reversed copy concatenated on the feature axis so a single matmul
    # produces both directions' input projections with time already aligned
    # to the fused loop index.
    xcat = jnp.concatenate([x, x[::-1]], axis=-1)      # (T, B, 2I)

    def spec(shape):
        nd = len(shape)
        return pl.BlockSpec(shape, lambda i, nd=nd: (0,) * nd)

    return pl.pallas_call(
        _bilstm_fc_kernel,
        out_shape=jax.ShapeDtypeStruct((T, B, O), x.dtype),
        grid_spec=pltpu.PrefetchScalarGridSpec(
            num_scalar_prefetch=0,
            grid=(1,),
            in_specs=[spec((T, B, 2 * I)),
                      spec((2 * I, 8 * H)),
                      spec((2 * H, 8 * H)),
                      spec((1, 8 * H)),
                      spec((2 * H, O)),
                      spec((1, O))],
            out_specs=spec((T, B, O)),
            scratch_shapes=[pltpu.VMEM((T, B, H), jnp.float32),
                            pltpu.VMEM((T, B, H), jnp.float32)],
        ),
        compiler_params=pltpu.CompilerParams(dimension_semantics=("arbitrary",)),
    )(xcat, wih_cat, whh_blk, b_cat, params["fcw"], params["fcb"])


def lstm_ref(x, params):
    """Pure-JAX reference matching PyTorch nn.LSTM(bidirectional=True) + Linear."""
    _, B, _ = x.shape
    H = params["whh_f"].shape[0]

    def run_dir(wih, whh, b, xs):
        def step(carry, x_t):
            h, c = carry
            gates = x_t @ wih + h @ whh + b
            i = jax.nn.sigmoid(gates[:, :H])
            f = jax.nn.sigmoid(gates[:, H:2 * H])
            g = jnp.tanh(gates[:, 2 * H:3 * H])
            o = jax.nn.sigmoid(gates[:, 3 * H:])
            c = f * c + i * g
            h = o * jnp.tanh(c)
            return (h, c), h
        init = (jnp.zeros((B, H), jnp.float32), jnp.zeros((B, H), jnp.float32))
        _, hs = lax.scan(step, init, xs)
        return hs

    hf = run_dir(params["wih_f"], params["whh_f"], params["b_f"], x)
    hr = run_dir(params["wih_r"], params["whh_r"], params["b_r"], x[::-1])[::-1]
    hid = jnp.concatenate([hf, hr], axis=-1)
    return hid @ params["fcw"] + params["fcb"]


def init_params(key, input_size, hidden_size, output_size):
    """Deterministic parameter init mimicking PyTorch shapes (stored transposed)."""
    H, I, O = hidden_size, input_size, output_size
    k_lstm = 1.0 / (H ** 0.5)
    k_fc = 1.0 / ((2 * H) ** 0.5)
    ks = jax.random.split(key, 12)
    u = lambda k, shape, b: jax.random.uniform(k, shape, jnp.float32, -b, b)
    params = {
        # forward direction (PyTorch weight_ih_l0 is (4H, I); we store (I, 4H))
        "wih_f": u(ks[0], (I, 4 * H), k_lstm),
        "whh_f": u(ks[1], (H, 4 * H), k_lstm),
        "b_f": (u(ks[2], (1, 4 * H), k_lstm) + u(ks[3], (1, 4 * H), k_lstm)),
        # reverse direction
        "wih_r": u(ks[4], (I, 4 * H), k_lstm),
        "whh_r": u(ks[5], (H, 4 * H), k_lstm),
        "b_r": (u(ks[6], (1, 4 * H), k_lstm) + u(ks[7], (1, 4 * H), k_lstm)),
        # fc: PyTorch (O, 2H); stored (2H, O)
        "fcw": u(ks[8], (2 * H, O), k_fc),
        "fcb": u(ks[9], (1, O), k_fc),
    }
    return params


if __name__ == "__main__":
    T, B, I, H, O = 8, 2, 16, 32, 8   # seq=8, batch=2, input=16, hidden=32, out=8
    key = jax.random.PRNGKey(0)
    k_x, k_p = jax.random.split(key)
    x = jax.random.normal(k_x, (T, B, I), jnp.float32)
    params = init_params(k_p, I, H, O)

    out = bilstm_fc(x, params)
    out = jax.block_until_ready(out)

    ref = lstm_ref(x, params)
    assert out.shape == (T, B, O)
    assert jnp.allclose(out, ref, atol=1e-4, rtol=1e-4), "mismatch vs reference"
    print("KERNEL_OK")
</pallas_src>

<mosaic_0001>
module attributes {stable_mosaic.version = 11 : i64} {
  func.func @_bilstm_fc_kernel(%arg0: i32, %arg1: memref<8x2x32xf32, #tpu.memory_space<vmem>>, %arg2: memref<32x256xf32, #tpu.memory_space<vmem>>, %arg3: memref<64x256xf32, #tpu.memory_space<vmem>>, %arg4: memref<1x256xf32, #tpu.memory_space<vmem>>, %arg5: memref<64x8xf32, #tpu.memory_space<vmem>>, %arg6: memref<1x8xf32, #tpu.memory_space<vmem>>, %arg7: memref<8x2x8xf32, #tpu.memory_space<vmem>>, %arg8: memref<8x2x32xf32, #tpu.memory_space<vmem>>, %arg9: memref<8x2x32xf32, #tpu.memory_space<vmem>>) attributes {dimension_semantics = [#tpu.dimension_semantics<arbitrary>], iteration_bounds = array<i64: 1>, scalar_prefetch = 0 : i64, scratch_operands = 2 : i64, tpu.core_type = #tpu.core_type<tc>, window_params = [{pipeline_mode = #tpu.pipeline_mode<synchronous>, transform_indices = @transform_0, window_bounds = array<i64: 8, 2, 32>}, {pipeline_mode = #tpu.pipeline_mode<synchronous>, transform_indices = @transform_1, window_bounds = array<i64: 32, 256>}, {pipeline_mode = #tpu.pipeline_mode<synchronous>, transform_indices = @transform_2, window_bounds = array<i64: 64, 256>}, {pipeline_mode = #tpu.pipeline_mode<synchronous>, transform_indices = @transform_3, window_bounds = array<i64: 1, 256>}, {pipeline_mode = #tpu.pipeline_mode<synchronous>, transform_indices = @transform_4, window_bounds = array<i64: 64, 8>}, {pipeline_mode = #tpu.pipeline_mode<synchronous>, transform_indices = @transform_5, window_bounds = array<i64: 1, 8>}, {pipeline_mode = #tpu.pipeline_mode<synchronous>, transform_indices = @transform_6, window_bounds = array<i64: 8, 2, 8>}]} {
    %c0 = arith.constant 0 : index
    %c0_0 = arith.constant 0 : index
    %c0_1 = arith.constant 0 : index
    %0 = vector.load %arg1[%c0, %c0_0, %c0_1] : memref<8x2x32xf32, #tpu.memory_space<vmem>>, vector<8x2x32xf32>
    %1 = vector.shape_cast %0 : vector<8x2x32xf32> to vector<16x32xf32>
    %c0_2 = arith.constant 0 : index
    %c0_3 = arith.constant 0 : index
    %2 = vector.load %arg2[%c0_2, %c0_3] : memref<32x256xf32, #tpu.memory_space<vmem>>, vector<32x256xf32>
    %cst = arith.constant dense<0.000000e+00> : vector<16x256xf32>
    %3 = tpu.matmul %1, %2, %cst {dimension_numbers = #tpu.dot_dimension_numbers<[1], [0], [0], [1], [0, 0, 1, 1], [], []>} : vector<16x32xf32>, vector<32x256xf32>, vector<16x256xf32> -> vector<16x256xf32>
    %c0_4 = arith.constant 0 : index
    %c0_5 = arith.constant 0 : index
    %4 = vector.load %arg4[%c0_4, %c0_5] : memref<1x256xf32, #tpu.memory_space<vmem>>, vector<1x256xf32>
    %5 = vector.broadcast %4 : vector<1x256xf32> to vector<16x256xf32>
    %6 = arith.addf %3, %5 : vector<16x256xf32>
    %c0_6 = arith.constant 0 : index
    %c0_7 = arith.constant 0 : index
    %7 = vector.load %arg3[%c0_6, %c0_7] : memref<64x256xf32, #tpu.memory_space<vmem>>, vector<64x256xf32>
    %cst_8 = arith.constant 0.000000e+00 : f32
    %8 = vector.broadcast %cst_8 : f32 to vector<2x64xf32>
    %cst_9 = arith.constant 0.000000e+00 : f32
    %9 = vector.broadcast %cst_9 : f32 to vector<2x64xf32>
    %10 = vector.extract_strided_slice %6 {offsets = [0, 0], sizes = [2, 256], strides = [1, 1]} : vector<16x256xf32> to vector<2x256xf32>
    %cst_10 = arith.constant dense<0.000000e+00> : vector<2x256xf32>
    %11 = tpu.matmul %8, %7, %cst_10 {dimension_numbers = #tpu.dot_dimension_numbers<[1], [0], [0], [1], [0, 0, 1, 1], [], []>} : vector<2x64xf32>, vector<64x256xf32>, vector<2x256xf32> -> vector<2x256xf32>
    %12 = arith.addf %10, %11 : vector<2x256xf32>
    %13 = vector.extract_strided_slice %12 {offsets = [0, 0], sizes = [2, 64], strides = [1, 1]} : vector<2x256xf32> to vector<2x64xf32>
    %14 = arith.negf %13 : vector<2x64xf32>
    %15 = math.exp %14 : vector<2x64xf32>
    %cst_11 = arith.constant 1.000000e+00 : f32
    %16 = vector.broadcast %cst_11 : f32 to vector<2x64xf32>
    %17 = arith.addf %16, %15 : vector<2x64xf32>
    %18 = arith.divf %16, %17 : vector<2x64xf32>
    %19 = vector.extract_strided_slice %12 {offsets = [0, 64], sizes = [2, 64], strides = [1, 1]} : vector<2x256xf32> to vector<2x64xf32>
    %20 = arith.negf %19 : vector<2x64xf32>
    %21 = math.exp %20 : vector<2x64xf32>
    %cst_12 = arith.constant 1.000000e+00 : f32
    %22 = vector.broadcast %cst_12 : f32 to vector<2x64xf32>
    %23 = arith.addf %22, %21 : vector<2x64xf32>
    %24 = arith.divf %22, %23 : vector<2x64xf32>
    %25 = vector.extract_strided_slice %12 {offsets = [0, 128], sizes = [2, 64], strides = [1, 1]} : vector<2x256xf32> to vector<2x64xf32>
    %26 = math.tanh %25 : vector<2x64xf32>
    %27 = vector.extract_strided_slice %12 {offsets = [0, 192], sizes = [2, 64], strides = [1, 1]} : vector<2x256xf32> to vector<2x64xf32>
    %28 = arith.negf %27 : vector<2x64xf32>
    %29 = math.exp %28 : vector<2x64xf32>
    %cst_13 = arith.constant 1.000000e+00 : f32
    %30 = vector.broadcast %cst_13 : f32 to vector<2x64xf32>
    %31 = arith.addf %30, %29 : vector<2x64xf32>
    %32 = arith.divf %30, %31 : vector<2x64xf32>
    %33 = arith.mulf %24, %9 : vector<2x64xf32>
    %34 = arith.mulf %18, %26 : vector<2x64xf32>
    %35 = arith.addf %33, %34 : vector<2x64xf32>
    %36 = math.tanh %35 : vector<2x64xf32>
    %37 = arith.mulf %32, %36 : vector<2x64xf32>
    %38 = vector.extract_strided_slice %37 {offsets = [0, 0], sizes = [2, 32], strides = [1, 1]} : vector<2x64xf32> to vector<2x32xf32>
    %c0_14 = arith.constant 0 : index
    %c0_15 = arith.constant 0 : index
    %c0_16 = arith.constant 0 : index
    %39 = vector.load %arg8[%c0_14, %c0_15, %c0_16] : memref<8x2x32xf32, #tpu.memory_space<vmem>>, vector<1x2x32xf32>
    %40 = vector.shape_cast %39 : vector<1x2x32xf32> to vector<2x32xf32>
    %41 = vector.shape_cast %38 : vector<2x32xf32> to vector<1x2x32xf32>
    tpu.vector_store %arg8[%c0_14, %c0_15, %c0_16], %41 {strides = array<i32>} : memref<8x2x32xf32, #tpu.memory_space<vmem>>, vector<1x2x32xf32>,
    %42 = vector.extract_strided_slice %37 {offsets = [0, 32], sizes = [2, 32], strides = [1, 1]} : vector<2x64xf32> to vector<2x32xf32>
    %c7 = arith.constant 7 : index
    %c0_17 = arith.constant 0 : index
    %c0_18 = arith.constant 0 : index
    %43 = vector.load %arg9[%c7, %c0_17, %c0_18] : memref<8x2x32xf32, #tpu.memory_space<vmem>>, vector<1x2x32xf32>
    %44 = vector.shape_cast %43 : vector<1x2x32xf32> to vector<2x32xf32>
    %45 = vector.shape_cast %42 : vector<2x32xf32> to vector<1x2x32xf32>
    tpu.vector_store %arg9[%c7, %c0_17, %c0_18], %45 {strides = array<i32>} : memref<8x2x32xf32, #tpu.memory_space<vmem>>, vector<1x2x32xf32>,
    %46 = vector.extract_strided_slice %6 {offsets = [2, 0], sizes = [2, 256], strides = [1, 1]} : vector<16x256xf32> to vector<2x256xf32>
    %cst_19 = arith.constant dense<0.000000e+00> : vector<2x256xf32>
    %47 = tpu.matmul %37, %7, %cst_19 {dimension_numbers = #tpu.dot_dimension_numbers<[1], [0], [0], [1], [0, 0, 1, 1], [], []>} : vector<2x64xf32>, vector<64x256xf32>, vector<2x256xf32> -> vector<2x256xf32>
    %48 = arith.addf %46, %47 : vector<2x256xf32>
    %49 = vector.extract_strided_slice %48 {offsets = [0, 0], sizes = [2, 64], strides = [1, 1]} : vector<2x256xf32> to vector<2x64xf32>
    %50 = arith.negf %49 : vector<2x64xf32>
    %51 = math.exp %50 : vector<2x64xf32>
    %cst_20 = arith.constant 1.000000e+00 : f32
    %52 = vector.broadcast %cst_20 : f32 to vector<2x64xf32>
    %53 = arith.addf %52, %51 : vector<2x64xf32>
    %54 = arith.divf %52, %53 : vector<2x64xf32>
    %55 = vector.extract_strided_slice %48 {offsets = [0, 64], sizes = [2, 64], strides = [1, 1]} : vector<2x256xf32> to vector<2x64xf32>
    %56 = arith.negf %55 : vector<2x64xf32>
    %57 = math.exp %56 : vector<2x64xf32>
    %cst_21 = arith.constant 1.000000e+00 : f32
    %58 = vector.broadcast %cst_21 : f32 to vector<2x64xf32>
    %59 = arith.addf %58, %57 : vector<2x64xf32>
    %60 = arith.divf %58, %59 : vector<2x64xf32>
    %61 = vector.extract_strided_slice %48 {offsets = [0, 128], sizes = [2, 64], strides = [1, 1]} : vector<2x256xf32> to vector<2x64xf32>
    %62 = math.tanh %61 : vector<2x64xf32>
    %63 = vector.extract_strided_slice %48 {offsets = [0, 192], sizes = [2, 64], strides = [1, 1]} : vector<2x256xf32> to vector<2x64xf32>
    %64 = arith.negf %63 : vector<2x64xf32>
    %65 = math.exp %64 : vector<2x64xf32>
    %cst_22 = arith.constant 1.000000e+00 : f32
    %66 = vector.broadcast %cst_22 : f32 to vector<2x64xf32>
    %67 = arith.addf %66, %65 : vector<2x64xf32>
    %68 = arith.divf %66, %67 : vector<2x64xf32>
    %69 = arith.mulf %60, %35 : vector<2x64xf32>
    %70 = arith.mulf %54, %62 : vector<2x64xf32>
    %71 = arith.addf %69, %70 : vector<2x64xf32>
    %72 = math.tanh %71 : vector<2x64xf32>
    %73 = arith.mulf %68, %72 : vector<2x64xf32>
    %74 = vector.extract_strided_slice %73 {offsets = [0, 0], sizes = [2, 32], strides = [1, 1]} : vector<2x64xf32> to vector<2x32xf32>
    %c1 = arith.constant 1 : index
    %c0_23 = arith.constant 0 : index
    %c0_24 = arith.constant 0 : index
    %75 = vector.load %arg8[%c1, %c0_23, %c0_24] : memref<8x2x32xf32, #tpu.memory_space<vmem>>, vector<1x2x32xf32>
    %76 = vector.shape_cast %75 : vector<1x2x32xf32> to vector<2x32xf32>
    %77 = vector.shape_cast %74 : vector<2x32xf32> to vector<1x2x32xf32>
    tpu.vector_store %arg8[%c1, %c0_23, %c0_24], %77 {strides = array<i32>} : memref<8x2x32xf32, #tpu.memory_space<vmem>>, vector<1x2x32xf32>,
    %78 = vector.extract_strided_slice %73 {offsets = [0, 32], sizes = [2, 32], strides = [1, 1]} : vector<2x64xf32> to vector<2x32xf32>
    %c6 = arith.constant 6 : index
    %c0_25 = arith.constant 0 : index
    %c0_26 = arith.constant 0 : index
    %79 = vector.load %arg9[%c6, %c0_25, %c0_26] : memref<8x2x32xf32, #tpu.memory_space<vmem>>, vector<1x2x32xf32>
    %80 = vector.shape_cast %79 : vector<1x2x32xf32> to vector<2x32xf32>
    %81 = vector.shape_cast %78 : vector<2x32xf32> to vector<1x2x32xf32>
    tpu.vector_store %arg9[%c6, %c0_25, %c0_26], %81 {strides = array<i32>} : memref<8x2x32xf32, #tpu.memory_space<vmem>>, vector<1x2x32xf32>,
    %82 = vector.extract_strided_slice %6 {offsets = [4, 0], sizes = [2, 256], strides = [1, 1]} : vector<16x256xf32> to vector<2x256xf32>
    %cst_27 = arith.constant dense<0.000000e+00> : vector<2x256xf32>
    %83 = tpu.matmul %73, %7, %cst_27 {dimension_numbers = #tpu.dot_dimension_numbers<[1], [0], [0], [1], [0, 0, 1, 1], [], []>} : vector<2x64xf32>, vector<64x256xf32>, vector<2x256xf32> -> vector<2x256xf32>
    %84 = arith.addf %82, %83 : vector<2x256xf32>
    %85 = vector.extract_strided_slice %84 {offsets = [0, 0], sizes = [2, 64], strides = [1, 1]} : vector<2x256xf32> to vector<2x64xf32>
    %86 = arith.negf %85 : vector<2x64xf32>
    %87 = math.exp %86 : vector<2x64xf32>
    %cst_28 = arith.constant 1.000000e+00 : f32
    %88 = vector.broadcast %cst_28 : f32 to vector<2x64xf32>
    %89 = arith.addf %88, %87 : vector<2x64xf32>
    %90 = arith.divf %88, %89 : vector<2x64xf32>
    %91 = vector.extract_strided_slice %84 {offsets = [0, 64], sizes = [2, 64], strides = [1, 1]} : vector<2x256xf32> to vector<2x64xf32>
    %92 = arith.negf %91 : vector<2x64xf32>
    %93 = math.exp %92 : vector<2x64xf32>
    %cst_29 = arith.constant 1.000000e+00 : f32
    %94 = vector.broadcast %cst_29 : f32 to vector<2x64xf32>
    %95 = arith.addf %94, %93 : vector<2x64xf32>
    %96 = arith.divf %94, %95 : vector<2x64xf32>
    %97 = vector.extract_strided_slice %84 {offsets = [0, 128], sizes = [2, 64], strides = [1, 1]} : vector<2x256xf32> to vector<2x64xf32>
    %98 = math.tanh %97 : vector<2x64xf32>
    %99 = vector.extract_strided_slice %84 {offsets = [0, 192], sizes = [2, 64], strides = [1, 1]} : vector<2x256xf32> to vector<2x64xf32>
    %100 = arith.negf %99 : vector<2x64xf32>
    %101 = math.exp %100 : vector<2x64xf32>
    %cst_30 = arith.constant 1.000000e+00 : f32
    %102 = vector.broadcast %cst_30 : f32 to vector<2x64xf32>
    %103 = arith.addf %102, %101 : vector<2x64xf32>
    %104 = arith.divf %102, %103 : vector<2x64xf32>
    %105 = arith.mulf %96, %71 : vector<2x64xf32>
    %106 = arith.mulf %90, %98 : vector<2x64xf32>
    %107 = arith.addf %105, %106 : vector<2x64xf32>
    %108 = math.tanh %107 : vector<2x64xf32>
    %109 = arith.mulf %104, %108 : vector<2x64xf32>
    %110 = vector.extract_strided_slice %109 {offsets = [0, 0], sizes = [2, 32], strides = [1, 1]} : vector<2x64xf32> to vector<2x32xf32>
    %c2 = arith.constant 2 : index
    %c0_31 = arith.constant 0 : index
    %c0_32 = arith.constant 0 : index
    %111 = vector.load %arg8[%c2, %c0_31, %c0_32] : memref<8x2x32xf32, #tpu.memory_space<vmem>>, vector<1x2x32xf32>
    %112 = vector.shape_cast %111 : vector<1x2x32xf32> to vector<2x32xf32>
    %113 = vector.shape_cast %110 : vector<2x32xf32> to vector<1x2x32xf32>
    tpu.vector_store %arg8[%c2, %c0_31, %c0_32], %113 {strides = array<i32>} : memref<8x2x32xf32, #tpu.memory_space<vmem>>, vector<1x2x32xf32>,
    %114 = vector.extract_strided_slice %109 {offsets = [0, 32], sizes = [2, 32], strides = [1, 1]} : vector<2x64xf32> to vector<2x32xf32>
    %c5 = arith.constant 5 : index
    %c0_33 = arith.constant 0 : index
    %c0_34 = arith.constant 0 : index
    %115 = vector.load %arg9[%c5, %c0_33, %c0_34] : memref<8x2x32xf32, #tpu.memory_space<vmem>>, vector<1x2x32xf32>
    %116 = vector.shape_cast %115 : vector<1x2x32xf32> to vector<2x32xf32>
    %117 = vector.shape_cast %114 : vector<2x32xf32> to vector<1x2x32xf32>
    tpu.vector_store %arg9[%c5, %c0_33, %c0_34], %117 {strides = array<i32>} : memref<8x2x32xf32, #tpu.memory_space<vmem>>, vector<1x2x32xf32>,
    %118 = vector.extract_strided_slice %6 {offsets = [6, 0], sizes = [2, 256], strides = [1, 1]} : vector<16x256xf32> to vector<2x256xf32>
    %cst_35 = arith.constant dense<0.000000e+00> : vector<2x256xf32>
    %119 = tpu.matmul %109, %7, %cst_35 {dimension_numbers = #tpu.dot_dimension_numbers<[1], [0], [0], [1], [0, 0, 1, 1], [], []>} : vector<2x64xf32>, vector<64x256xf32>, vector<2x256xf32> -> vector<2x256xf32>
    %120 = arith.addf %118, %119 : vector<2x256xf32>
    %121 = vector.extract_strided_slice %120 {offsets = [0, 0], sizes = [2, 64], strides = [1, 1]} : vector<2x256xf32> to vector<2x64xf32>
    %122 = arith.negf %121 : vector<2x64xf32>
    %123 = math.exp %122 : vector<2x64xf32>
    %cst_36 = arith.constant 1.000000e+00 : f32
    %124 = vector.broadcast %cst_36 : f32 to vector<2x64xf32>
    %125 = arith.addf %124, %123 : vector<2x64xf32>
    %126 = arith.divf %124, %125 : vector<2x64xf32>
    %127 = vector.extract_strided_slice %120 {offsets = [0, 64], sizes = [2, 64], strides = [1, 1]} : vector<2x256xf32> to vector<2x64xf32>
    %128 = arith.negf %127 : vector<2x64xf32>
    %129 = math.exp %128 : vector<2x64xf32>
    %cst_37 = arith.constant 1.000000e+00 : f32
    %130 = vector.broadcast %cst_37 : f32 to vector<2x64xf32>
    %131 = arith.addf %130, %129 : vector<2x64xf32>
    %132 = arith.divf %130, %131 : vector<2x64xf32>
    %133 = vector.extract_strided_slice %120 {offsets = [0, 128], sizes = [2, 64], strides = [1, 1]} : vector<2x256xf32> to vector<2x64xf32>
    %134 = math.tanh %133 : vector<2x64xf32>
    %135 = vector.extract_strided_slice %120 {offsets = [0, 192], sizes = [2, 64], strides = [1, 1]} : vector<2x256xf32> to vector<2x64xf32>
    %136 = arith.negf %135 : vector<2x64xf32>
    %137 = math.exp %136 : vector<2x64xf32>
    %cst_38 = arith.constant 1.000000e+00 : f32
    %138 = vector.broadcast %cst_38 : f32 to vector<2x64xf32>
    %139 = arith.addf %138, %137 : vector<2x64xf32>
    %140 = arith.divf %138, %139 : vector<2x64xf32>
    %141 = arith.mulf %132, %107 : vector<2x64xf32>
    %142 = arith.mulf %126, %134 : vector<2x64xf32>
    %143 = arith.addf %141, %142 : vector<2x64xf32>
    %144 = math.tanh %143 : vector<2x64xf32>
    %145 = arith.mulf %140, %144 : vector<2x64xf32>
    %146 = vector.extract_strided_slice %145 {offsets = [0, 0], sizes = [2, 32], strides = [1, 1]} : vector<2x64xf32> to vector<2x32xf32>
    %c3 = arith.constant 3 : index
    %c0_39 = arith.constant 0 : index
    %c0_40 = arith.constant 0 : index
    %147 = vector.load %arg8[%c3, %c0_39, %c0_40] : memref<8x2x32xf32, #tpu.memory_space<vmem>>, vector<1x2x32xf32>
    %148 = vector.shape_cast %147 : vector<1x2x32xf32> to vector<2x32xf32>
    %149 = vector.shape_cast %146 : vector<2x32xf32> to vector<1x2x32xf32>
    tpu.vector_store %arg8[%c3, %c0_39, %c0_40], %149 {strides = array<i32>} : memref<8x2x32xf32, #tpu.memory_space<vmem>>, vector<1x2x32xf32>,
    %150 = vector.extract_strided_slice %145 {offsets = [0, 32], sizes = [2, 32], strides = [1, 1]} : vector<2x64xf32> to vector<2x32xf32>
    %c4 = arith.constant 4 : index
    %c0_41 = arith.constant 0 : index
    %c0_42 = arith.constant 0 : index
    %151 = vector.load %arg9[%c4, %c0_41, %c0_42] : memref<8x2x32xf32, #tpu.memory_space<vmem>>, vector<1x2x32xf32>
    %152 = vector.shape_cast %151 : vector<1x2x32xf32> to vector<2x32xf32>
    %153 = vector.shape_cast %150 : vector<2x32xf32> to vector<1x2x32xf32>
    tpu.vector_store %arg9[%c4, %c0_41, %c0_42], %153 {strides = array<i32>} : memref<8x2x32xf32, #tpu.memory_space<vmem>>, vector<1x2x32xf32>,
    %154 = vector.extract_strided_slice %6 {offsets = [8, 0], sizes = [2, 256], strides = [1, 1]} : vector<16x256xf32> to vector<2x256xf32>
    %cst_43 = arith.constant dense<0.000000e+00> : vector<2x256xf32>
    %155 = tpu.matmul %145, %7, %cst_43 {dimension_numbers = #tpu.dot_dimension_numbers<[1], [0], [0], [1], [0, 0, 1, 1], [], []>} : vector<2x64xf32>, vector<64x256xf32>, vector<2x256xf32> -> vector<2x256xf32>
    %156 = arith.addf %154, %155 : vector<2x256xf32>
    %157 = vector.extract_strided_slice %156 {offsets = [0, 0], sizes = [2, 64], strides = [1, 1]} : vector<2x256xf32> to vector<2x64xf32>
    %158 = arith.negf %157 : vector<2x64xf32>
    %159 = math.exp %158 : vector<2x64xf32>
    %cst_44 = arith.constant 1.000000e+00 : f32
    %160 = vector.broadcast %cst_44 : f32 to vector<2x64xf32>
    %161 = arith.addf %160, %159 : vector<2x64xf32>
    %162 = arith.divf %160, %161 : vector<2x64xf32>
    %163 = vector.extract_strided_slice %156 {offsets = [0, 64], sizes = [2, 64], strides = [1, 1]} : vector<2x256xf32> to vector<2x64xf32>
    %164 = arith.negf %163 : vector<2x64xf32>
    %165 = math.exp %164 : vector<2x64xf32>
    %cst_45 = arith.constant 1.000000e+00 : f32
    %166 = vector.broadcast %cst_45 : f32 to vector<2x64xf32>
    %167 = arith.addf %166, %165 : vector<2x64xf32>
    %168 = arith.divf %166, %167 : vector<2x64xf32>
    %169 = vector.extract_strided_slice %156 {offsets = [0, 128], sizes = [2, 64], strides = [1, 1]} : vector<2x256xf32> to vector<2x64xf32>
    %170 = math.tanh %169 : vector<2x64xf32>
    %171 = vector.extract_strided_slice %156 {offsets = [0, 192], sizes = [2, 64], strides = [1, 1]} : vector<2x256xf32> to vector<2x64xf32>
    %172 = arith.negf %171 : vector<2x64xf32>
    %173 = math.exp %172 : vector<2x64xf32>
    %cst_46 = arith.constant 1.000000e+00 : f32
    %174 = vector.broadcast %cst_46 : f32 to vector<2x64xf32>
    %175 = arith.addf %174, %173 : vector<2x64xf32>
    %176 = arith.divf %174, %175 : vector<2x64xf32>
    %177 = arith.mulf %168, %143 : vector<2x64xf32>
    %178 = arith.mulf %162, %170 : vector<2x64xf32>
    %179 = arith.addf %177, %178 : vector<2x64xf32>
    %180 = math.tanh %179 : vector<2x64xf32>
    %181 = arith.mulf %176, %180 : vector<2x64xf32>
    %182 = vector.extract_strided_slice %181 {offsets = [0, 0], sizes = [2, 32], strides = [1, 1]} : vector<2x64xf32> to vector<2x32xf32>
    %c4_47 = arith.constant 4 : index
    %c0_48 = arith.constant 0 : index
    %c0_49 = arith.constant 0 : index
    %183 = vector.load %arg8[%c4_47, %c0_48, %c0_49] : memref<8x2x32xf32, #tpu.memory_space<vmem>>, vector<1x2x32xf32>
    %184 = vector.shape_cast %183 : vector<1x2x32xf32> to vector<2x32xf32>
    %185 = vector.shape_cast %182 : vector<2x32xf32> to vector<1x2x32xf32>
    tpu.vector_store %arg8[%c4_47, %c0_48, %c0_49], %185 {strides = array<i32>} : memref<8x2x32xf32, #tpu.memory_space<vmem>>, vector<1x2x32xf32>,
    %186 = vector.extract_strided_slice %181 {offsets = [0, 32], sizes = [2, 32], strides = [1, 1]} : vector<2x64xf32> to vector<2x32xf32>
    %c3_50 = arith.constant 3 : index
    %c0_51 = arith.constant 0 : index
    %c0_52 = arith.constant 0 : index
    %187 = vector.load %arg9[%c3_50, %c0_51, %c0_52] : memref<8x2x32xf32, #tpu.memory_space<vmem>>, vector<1x2x32xf32>
    %188 = vector.shape_cast %187 : vector<1x2x32xf32> to vector<2x32xf32>
    %189 = vector.shape_cast %186 : vector<2x32xf32> to vector<1x2x32xf32>
    tpu.vector_store %arg9[%c3_50, %c0_51, %c0_52], %189 {strides = array<i32>} : memref<8x2x32xf32, #tpu.memory_space<vmem>>, vector<1x2x32xf32>,
    %190 = vector.extract_strided_slice %6 {offsets = [10, 0], sizes = [2, 256], strides = [1, 1]} : vector<16x256xf32> to vector<2x256xf32>
    %cst_53 = arith.constant dense<0.000000e+00> : vector<2x256xf32>
    %191 = tpu.matmul %181, %7, %cst_53 {dimension_numbers = #tpu.dot_dimension_numbers<[1], [0], [0], [1], [0, 0, 1, 1], [], []>} : vector<2x64xf32>, vector<64x256xf32>, vector<2x256xf32> -> vector<2x256xf32>
    %192 = arith.addf %190, %191 : vector<2x256xf32>
    %193 = vector.extract_strided_slice %192 {offsets = [0, 0], sizes = [2, 64], strides = [1, 1]} : vector<2x256xf32> to vector<2x64xf32>
    %194 = arith.negf %193 : vector<2x64xf32>
    %195 = math.exp %194 : vector<2x64xf32>
    %cst_54 = arith.constant 1.000000e+00 : f32
    %196 = vector.broadcast %cst_54 : f32 to vector<2x64xf32>
    %197 = arith.addf %196, %195 : vector<2x64xf32>
    %198 = arith.divf %196, %197 : vector<2x64xf32>
    %199 = vector.extract_strided_slice %192 {offsets = [0, 64], sizes = [2, 64], strides = [1, 1]} : vector<2x256xf32> to vector<2x64xf32>
    %200 = arith.negf %199 : vector<2x64xf32>
    %201 = math.exp %200 : vector<2x64xf32>
    %cst_55 = arith.constant 1.000000e+00 : f32
    %202 = vector.broadcast %cst_55 : f32 to vector<2x64xf32>
    %203 = arith.addf %202, %201 : vector<2x64xf32>
    %204 = arith.divf %202, %203 : vector<2x64xf32>
    %205 = vector.extract_strided_slice %192 {offsets = [0, 128], sizes = [2, 64], strides = [1, 1]} : vector<2x256xf32> to vector<2x64xf32>
    %206 = math.tanh %205 : vector<2x64xf32>
    %207 = vector.extract_strided_slice %192 {offsets = [0, 192], sizes = [2, 64], strides = [1, 1]} : vector<2x256xf32> to vector<2x64xf32>
    %208 = arith.negf %207 : vector<2x64xf32>
    %209 = math.exp %208 : vector<2x64xf32>
    %cst_56 = arith.constant 1.000000e+00 : f32
    %210 = vector.broadcast %cst_56 : f32 to vector<2x64xf32>
    %211 = arith.addf %210, %209 : vector<2x64xf32>
    %212 = arith.divf %210, %211 : vector<2x64xf32>
    %213 = arith.mulf %204, %179 : vector<2x64xf32>
    %214 = arith.mulf %198, %206 : vector<2x64xf32>
    %215 = arith.addf %213, %214 : vector<2x64xf32>
    %216 = math.tanh %215 : vector<2x64xf32>
    %217 = arith.mulf %212, %216 : vector<2x64xf32>
    %218 = vector.extract_strided_slice %217 {offsets = [0, 0], sizes = [2, 32], strides = [1, 1]} : vector<2x64xf32> to vector<2x32xf32>
    %c5_57 = arith.constant 5 : index
    %c0_58 = arith.constant 0 : index
    %c0_59 = arith.constant 0 : index
    %219 = vector.load %arg8[%c5_57, %c0_58, %c0_59] : memref<8x2x32xf32, #tpu.memory_space<vmem>>, vector<1x2x32xf32>
    %220 = vector.shape_cast %219 : vector<1x2x32xf32> to vector<2x32xf32>
    %221 = vector.shape_cast %218 : vector<2x32xf32> to vector<1x2x32xf32>
    tpu.vector_store %arg8[%c5_57, %c0_58, %c0_59], %221 {strides = array<i32>} : memref<8x2x32xf32, #tpu.memory_space<vmem>>, vector<1x2x32xf32>,
    %222 = vector.extract_strided_slice %217 {offsets = [0, 32], sizes = [2, 32], strides = [1, 1]} : vector<2x64xf32> to vector<2x32xf32>
    %c2_60 = arith.constant 2 : index
    %c0_61 = arith.constant 0 : index
    %c0_62 = arith.constant 0 : index
    %223 = vector.load %arg9[%c2_60, %c0_61, %c0_62] : memref<8x2x32xf32, #tpu.memory_space<vmem>>, vector<1x2x32xf32>
    %224 = vector.shape_cast %223 : vector<1x2x32xf32> to vector<2x32xf32>
    %225 = vector.shape_cast %222 : vector<2x32xf32> to vector<1x2x32xf32>
    tpu.vector_store %arg9[%c2_60, %c0_61, %c0_62], %225 {strides = array<i32>} : memref<8x2x32xf32, #tpu.memory_space<vmem>>, vector<1x2x32xf32>,
    %226 = vector.extract_strided_slice %6 {offsets = [12, 0], sizes = [2, 256], strides = [1, 1]} : vector<16x256xf32> to vector<2x256xf32>
    %cst_63 = arith.constant dense<0.000000e+00> : vector<2x256xf32>
    %227 = tpu.matmul %217, %7, %cst_63 {dimension_numbers = #tpu.dot_dimension_numbers<[1], [0], [0], [1], [0, 0, 1, 1], [], []>} : vector<2x64xf32>, vector<64x256xf32>, vector<2x256xf32> -> vector<2x256xf32>
    %228 = arith.addf %226, %227 : vector<2x256xf32>
    %229 = vector.extract_strided_slice %228 {offsets = [0, 0], sizes = [2, 64], strides = [1, 1]} : vector<2x256xf32> to vector<2x64xf32>
    %230 = arith.negf %229 : vector<2x64xf32>
    %231 = math.exp %230 : vector<2x64xf32>
    %cst_64 = arith.constant 1.000000e+00 : f32
    %232 = vector.broadcast %cst_64 : f32 to vector<2x64xf32>
    %233 = arith.addf %232, %231 : vector<2x64xf32>
    %234 = arith.divf %232, %233 : vector<2x64xf32>
    %235 = vector.extract_strided_slice %228 {offsets = [0, 64], sizes = [2, 64], strides = [1, 1]} : vector<2x256xf32> to vector<2x64xf32>
    %236 = arith.negf %235 : vector<2x64xf32>
    %237 = math.exp %236 : vector<2x64xf32>
    %cst_65 = arith.constant 1.000000e+00 : f32
    %238 = vector.broadcast %cst_65 : f32 to vector<2x64xf32>
    %239 = arith.addf %238, %237 : vector<2x64xf32>
    %240 = arith.divf %238, %239 : vector<2x64xf32>
    %241 = vector.extract_strided_slice %228 {offsets = [0, 128], sizes = [2, 64], strides = [1, 1]} : vector<2x256xf32> to vector<2x64xf32>
    %242 = math.tanh %241 : vector<2x64xf32>
    %243 = vector.extract_strided_slice %228 {offsets = [0, 192], sizes = [2, 64], strides = [1, 1]} : vector<2x256xf32> to vector<2x64xf32>
    %244 = arith.negf %243 : vector<2x64xf32>
    %245 = math.exp %244 : vector<2x64xf32>
    %cst_66 = arith.constant 1.000000e+00 : f32
    %246 = vector.broadcast %cst_66 : f32 to vector<2x64xf32>
    %247 = arith.addf %246, %245 : vector<2x64xf32>
    %248 = arith.divf %246, %247 : vector<2x64xf32>
    %249 = arith.mulf %240, %215 : vector<2x64xf32>
    %250 = arith.mulf %234, %242 : vector<2x64xf32>
    %251 = arith.addf %249, %250 : vector<2x64xf32>
    %252 = math.tanh %251 : vector<2x64xf32>
    %253 = arith.mulf %248, %252 : vector<2x64xf32>
    %254 = vector.extract_strided_slice %253 {offsets = [0, 0], sizes = [2, 32], strides = [1, 1]} : vector<2x64xf32> to vector<2x32xf32>
    %c6_67 = arith.constant 6 : index
    %c0_68 = arith.constant 0 : index
    %c0_69 = arith.constant 0 : index
    %255 = vector.load %arg8[%c6_67, %c0_68, %c0_69] : memref<8x2x32xf32, #tpu.memory_space<vmem>>, vector<1x2x32xf32>
    %256 = vector.shape_cast %255 : vector<1x2x32xf32> to vector<2x32xf32>
    %257 = vector.shape_cast %254 : vector<2x32xf32> to vector<1x2x32xf32>
    tpu.vector_store %arg8[%c6_67, %c0_68, %c0_69], %257 {strides = array<i32>} : memref<8x2x32xf32, #tpu.memory_space<vmem>>, vector<1x2x32xf32>,
    %258 = vector.extract_strided_slice %253 {offsets = [0, 32], sizes = [2, 32], strides = [1, 1]} : vector<2x64xf32> to vector<2x32xf32>
    %c1_70 = arith.constant 1 : index
    %c0_71 = arith.constant 0 : index
    %c0_72 = arith.constant 0 : index
    %259 = vector.load %arg9[%c1_70, %c0_71, %c0_72] : memref<8x2x32xf32, #tpu.memory_space<vmem>>, vector<1x2x32xf32>
    %260 = vector.shape_cast %259 : vector<1x2x32xf32> to vector<2x32xf32>
    %261 = vector.shape_cast %258 : vector<2x32xf32> to vector<1x2x32xf32>
    tpu.vector_store %arg9[%c1_70, %c0_71, %c0_72], %261 {strides = array<i32>} : memref<8x2x32xf32, #tpu.memory_space<vmem>>, vector<1x2x32xf32>,
    %262 = vector.extract_strided_slice %6 {offsets = [14, 0], sizes = [2, 256], strides = [1, 1]} : vector<16x256xf32> to vector<2x256xf32>
    %cst_73 = arith.constant dense<0.000000e+00> : vector<2x256xf32>
    %263 = tpu.matmul %253, %7, %cst_73 {dimension_numbers = #tpu.dot_dimension_numbers<[1], [0], [0], [1], [0, 0, 1, 1], [], []>} : vector<2x64xf32>, vector<64x256xf32>, vector<2x256xf32> -> vector<2x256xf32>
    %264 = arith.addf %262, %263 : vector<2x256xf32>
    %265 = vector.extract_strided_slice %264 {offsets = [0, 0], sizes = [2, 64], strides = [1, 1]} : vector<2x256xf32> to vector<2x64xf32>
    %266 = arith.negf %265 : vector<2x64xf32>
    %267 = math.exp %266 : vector<2x64xf32>
    %cst_74 = arith.constant 1.000000e+00 : f32
    %268 = vector.broadcast %cst_74 : f32 to vector<2x64xf32>
    %269 = arith.addf %268, %267 : vector<2x64xf32>
    %270 = arith.divf %268, %269 : vector<2x64xf32>
    %271 = vector.extract_strided_slice %264 {offsets = [0, 64], sizes = [2, 64], strides = [1, 1]} : vector<2x256xf32> to vector<2x64xf32>
    %272 = arith.negf %271 : vector<2x64xf32>
    %273 = math.exp %272 : vector<2x64xf32>
    %cst_75 = arith.constant 1.000000e+00 : f32
    %274 = vector.broadcast %cst_75 : f32 to vector<2x64xf32>
    %275 = arith.addf %274, %273 : vector<2x64xf32>
    %276 = arith.divf %274, %275 : vector<2x64xf32>
    %277 = vector.extract_strided_slice %264 {offsets = [0, 128], sizes = [2, 64], strides = [1, 1]} : vector<2x256xf32> to vector<2x64xf32>
    %278 = math.tanh %277 : vector<2x64xf32>
    %279 = vector.extract_strided_slice %264 {offsets = [0, 192], sizes = [2, 64], strides = [1, 1]} : vector<2x256xf32> to vector<2x64xf32>
    %280 = arith.negf %279 : vector<2x64xf32>
    %281 = math.exp %280 : vector<2x64xf32>
    %cst_76 = arith.constant 1.000000e+00 : f32
    %282 = vector.broadcast %cst_76 : f32 to vector<2x64xf32>
    %283 = arith.addf %282, %281 : vector<2x64xf32>
    %284 = arith.divf %282, %283 : vector<2x64xf32>
    %285 = arith.mulf %276, %251 : vector<2x64xf32>
    %286 = arith.mulf %270, %278 : vector<2x64xf32>
    %287 = arith.addf %285, %286 : vector<2x64xf32>
    %288 = math.tanh %287 : vector<2x64xf32>
    %289 = arith.mulf %284, %288 : vector<2x64xf32>
    %290 = vector.extract_strided_slice %289 {offsets = [0, 0], sizes = [2, 32], strides = [1, 1]} : vector<2x64xf32> to vector<2x32xf32>
    %c7_77 = arith.constant 7 : index
    %c0_78 = arith.constant 0 : index
    %c0_79 = arith.constant 0 : index
    %291 = vector.load %arg8[%c7_77, %c0_78, %c0_79] : memref<8x2x32xf32, #tpu.memory_space<vmem>>, vector<1x2x32xf32>
    %292 = vector.shape_cast %291 : vector<1x2x32xf32> to vector<2x32xf32>
    %293 = vector.shape_cast %290 : vector<2x32xf32> to vector<1x2x32xf32>
    tpu.vector_store %arg8[%c7_77, %c0_78, %c0_79], %293 {strides = array<i32>} : memref<8x2x32xf32, #tpu.memory_space<vmem>>, vector<1x2x32xf32>,
    %294 = vector.extract_strided_slice %289 {offsets = [0, 32], sizes = [2, 32], strides = [1, 1]} : vector<2x64xf32> to vector<2x32xf32>
    %c0_80 = arith.constant 0 : index
    %c0_81 = arith.constant 0 : index
    %c0_82 = arith.constant 0 : index
    %295 = vector.load %arg9[%c0_80, %c0_81, %c0_82] : memref<8x2x32xf32, #tpu.memory_space<vmem>>, vector<1x2x32xf32>
    %296 = vector.shape_cast %295 : vector<1x2x32xf32> to vector<2x32xf32>
    %297 = vector.shape_cast %294 : vector<2x32xf32> to vector<1x2x32xf32>
    tpu.vector_store %arg9[%c0_80, %c0_81, %c0_82], %297 {strides = array<i32>} : memref<8x2x32xf32, #tpu.memory_space<vmem>>, vector<1x2x32xf32>,
    %c0_83 = arith.constant 0 : index
    %c0_84 = arith.constant 0 : index
    %c0_85 = arith.constant 0 : index
    %298 = vector.load %arg8[%c0_83, %c0_84, %c0_85] : memref<8x2x32xf32, #tpu.memory_space<vmem>>, vector<8x2x32xf32>
    %299 = vector.shape_cast %298 : vector<8x2x32xf32> to vector<16x32xf32>
    %c0_86 = arith.constant 0 : index
    %c0_87 = arith.constant 0 : index
    %c0_88 = arith.constant 0 : index
    %300 = vector.load %arg9[%c0_86, %c0_87, %c0_88] : memref<8x2x32xf32, #tpu.memory_space<vmem>>, vector<8x2x32xf32>
    %301 = vector.shape_cast %300 : vector<8x2x32xf32> to vector<16x32xf32>
    %c0_89 = arith.constant 0 : index
    %c0_90 = arith.constant 0 : index
    %302 = vector.load %arg5[%c0_89, %c0_90] : memref<64x8xf32, #tpu.memory_space<vmem>>, vector<32x8xf32>
    %cst_91 = arith.constant dense<0.000000e+00> : vector<16x8xf32>
    %303 = tpu.matmul %299, %302, %cst_91 {dimension_numbers = #tpu.dot_dimension_numbers<[1], [0], [0], [1], [0, 0, 1, 1], [], []>} : vector<16x32xf32>, vector<32x8xf32>, vector<16x8xf32> -> vector<16x8xf32>
    %c32 = arith.constant 32 : index
    %c0_92 = arith.constant 0 : index
    %304 = vector.load %arg5[%c32, %c0_92] : memref<64x8xf32, #tpu.memory_space<vmem>>, vector<32x8xf32>
    %cst_93 = arith.constant dense<0.000000e+00> : vector<16x8xf32>
    %305 = tpu.matmul %301, %304, %cst_93 {dimension_numbers = #tpu.dot_dimension_numbers<[1], [0], [0], [1], [0, 0, 1, 1], [], []>} : vector<16x32xf32>, vector<32x8xf32>, vector<16x8xf32> -> vector<16x8xf32>
    %306 = arith.addf %303, %305 : vector<16x8xf32>
    %c0_94 = arith.constant 0 : index
    %c0_95 = arith.constant 0 : index
    %307 = vector.load %arg6[%c0_94, %c0_95] : memref<1x8xf32, #tpu.memory_space<vmem>>, vector<1x8xf32>
    %308 = vector.broadcast %307 : vector<1x8xf32> to vector<16x8xf32>
    %309 = arith.addf %306, %308 : vector<16x8xf32>
    %310 = vector.shape_cast %309 : vector<16x8xf32> to vector<8x2x8xf32>
    %c0_96 = arith.constant 0 : index
    %c0_97 = arith.constant 0 : index
    %c0_98 = arith.constant 0 : index
    %311 = vector.load %arg7[%c0_96, %c0_97, %c0_98] : memref<8x2x8xf32, #tpu.memory_space<vmem>>, vector<8x2x8xf32>
    tpu.vector_store %arg7[%c0_96, %c0_97, %c0_98], %310 {strides = array<i32>} : memref<8x2x8xf32, #tpu.memory_space<vmem>>, vector<8x2x8xf32>,
    return
  }
  func.func @transform_0(%arg0: i32) -> (i32, i32, i32) {
    %c0_i32 = arith.constant 0 : i32
    %c0_i32_0 = arith.constant 0 : i32
    %c0_i32_1 = arith.constant 0 : i32
    %c0_i32_2 = arith.constant 0 : i32
    return %c0_i32, %c0_i32_0, %c0_i32_1 : i32, i32, i32
  }
  func.func @transform_1(%arg0: i32) -> (i32, i32) {
    %c0_i32 = arith.constant 0 : i32
    %c0_i32_0 = arith.constant 0 : i32
    %c0_i32_1 = arith.constant 0 : i32
    return %c0_i32, %c0_i32_0 : i32, i32
  }
  func.func @transform_2(%arg0: i32) -> (i32, i32) {
    %c0_i32 = arith.constant 0 : i32
    %c0_i32_0 = arith.constant 0 : i32
    %c0_i32_1 = arith.constant 0 : i32
    return %c0_i32, %c0_i32_0 : i32, i32
  }
  func.func @transform_3(%arg0: i32) -> (i32, i32) {
    %c0_i32 = arith.constant 0 : i32
    %c0_i32_0 = arith.constant 0 : i32
    %c0_i32_1 = arith.constant 0 : i32
    return %c0_i32, %c0_i32_0 : i32, i32
  }
  func.func @transform_4(%arg0: i32) -> (i32, i32) {
    %c0_i32 = arith.constant 0 : i32
    %c0_i32_0 = arith.constant 0 : i32
    %c0_i32_1 = arith.constant 0 : i32
    return %c0_i32, %c0_i32_0 : i32, i32
  }
  func.func @transform_5(%arg0: i32) -> (i32, i32) {
    %c0_i32 = arith.constant 0 : i32
    %c0_i32_0 = arith.constant 0 : i32
    %c0_i32_1 = arith.constant 0 : i32
    return %c0_i32, %c0_i32_0 : i32, i32
  }
  func.func @transform_6(%arg0: i32) -> (i32, i32, i32) {
    %c0_i32 = arith.constant 0 : i32
    %c0_i32_0 = arith.constant 0 : i32
    %c0_i32_1 = arith.constant 0 : i32
    %c0_i32_2 = arith.constant 0 : i32
    return %c0_i32, %c0_i32_0, %c0_i32_1 : i32, i32, i32
  }
}

</mosaic_0001>

<llo_original>
// kernel: tpu_custom_call.1
$region0: #{tpu_custom_call.1}
  #allocation0 [shape = 'u32[]', space=smem, size = 0x4, offset = 0x4, fixed_abs, tag = 'smem constant byte address 0x4 - core index']
  #allocation1 [shape = 'u32[144,128]{1,0:T(1,128)}', space=vmem, size = 0x12000, scoped, tag = 'internal scratch']
  #allocation2 [shape = 'f32[8,2,32]{2,1,0:T(2,128)}', space=vmem, size = 0x2000, scoped, tag = 'scratch operand']
  #allocation3 [shape = 'f32[8,2,32]{2,1,0:T(2,128)}', space=vmem, size = 0x2000, scoped, tag = 'scratch operand']
  %s0 = inlined_call_operand.hbm [shape: f32[8,2,32], index: 0, kind: input, shape index: {}]
  %s1 = inlined_call_operand.vmem [shape: f32[32,256], index: 1, kind: input, shape index: {}]
  %s2 = inlined_call_operand.hbm [shape: f32[64,256], index: 2, kind: input, shape index: {}]
  %s3 = inlined_call_operand.vmem [shape: f32[1,256], index: 3, kind: input, shape index: {}]
  %s4 = inlined_call_operand.vmem [shape: f32[64,8], index: 4, kind: input, shape index: {}]
  %s5 = inlined_call_operand.vmem [shape: f32[1,8], index: 5, kind: input, shape index: {}]
  %s6 = inlined_call_operand.hbm [shape: f32[8,2,8], index: 6, kind: output, shape index: {}]
  %s7 = sld [smem:[#allocation0]]
  $region42: #{tpu_custom_call.1} parent=0
    _
  %s9 = ssub.s32 1, %s7
  %s10 = scalar_select 0, %s9, %s7
  $region1: #{tpu_custom_call.1} parent=0
    #allocation4 [shape = 'u8[8192]{0}', space=vmem, size = 0x2000, scoped, tag = 'input window, operand 0, single buffered']
    #allocation5 [shape = 's32[1]{0}', space=sflag, size = 0x4, scoped, tag = 'scoped memory for tpu_custom_call.1']
    #allocation6 [shape = 's32[1]{0}', space=sflag, size = 0x4, scoped, tag = 'scoped memory for tpu_custom_call.1']
    #allocation7 [shape = 'u8[65536]{0}', space=vmem, size = 0x10000, scoped, tag = 'input window, operand 2, single buffered']
    #allocation8 [shape = 's32[1]{0}', space=sflag, size = 0x4, scoped, tag = 'scoped memory for tpu_custom_call.1']
    #allocation9 [shape = 'u8[8192]{0}', space=vmem, size = 0x2000, scoped, tag = 'output window, operand 0, single buffered']
    %11 = vsyncpa [#allocation5], 0
    %12 = vsyncpa [#allocation8], 0
    %13 = vsyncpa [#allocation6], 0
    // Predicated region
    $region2: #{tpu_custom_call.1} parent=1 // pred_check
      _
    $region3: #{tpu_custom_call.1} parent=1 // pred_check_branch
      %15 = sbr.rel (0) target = $region5
    $region4: #{tpu_custom_call.1} parent=1 // pred_region
      %s17 = ssub.s32 256, 256
      %18 = vsyncadd [#allocation5], %s17
      %s19 = sshll.u32 [#allocation4], 4
      %s20 = int_to_ptr.vmem [resolvable:$true] %s19
      %25 = dma.hbm_to_vmem [thread:$0]  %s0, 256, %s20, [#allocation5], 32, 32, 2
    $region5: #{tpu_custom_call.1} parent=1 // pred_fallthru
      _
    // Predicated region
    $region6: #{tpu_custom_call.1} parent=1 // pred_check
      _
    $region7: #{tpu_custom_call.1} parent=1 // pred_check_branch
      %27 = sbr.rel (0) target = $region9
    $region8: #{tpu_custom_call.1} parent=1 // pred_region
      _
    $region9: #{tpu_custom_call.1} parent=1 // pred_fallthru
      _
    // Predicated region
    $region10: #{tpu_custom_call.1} parent=1 // pred_check
      _
    $region11: #{tpu_custom_call.1} parent=1 // pred_check_branch
      %29 = sbr.rel (0) target = $region13
    $region12: #{tpu_custom_call.1} parent=1 // pred_region
      %s31 = ssub.s32 2048, 2048
      %32 = vsyncadd [#allocation8], %s31
      %s33 = sshll.u32 [#allocation7], 4
      %s34 = int_to_ptr.vmem [resolvable:$true] %s33
      %39 = dma.hbm_to_vmem [thread:$0]  %s2, 2048, %s34, [#allocation8], 256, 256, 16
    $region13: #{tpu_custom_call.1} parent=1 // pred_fallthru
      _
    // Predicated region
    $region14: #{tpu_custom_call.1} parent=1 // pred_check
      _
    $region15: #{tpu_custom_call.1} parent=1 // pred_check_branch
      %41 = sbr.rel (0) target = $region17
    $region16: #{tpu_custom_call.1} parent=1 // pred_region
      _
    $region17: #{tpu_custom_call.1} parent=1 // pred_fallthru
      _
    // Predicated region
    $region18: #{tpu_custom_call.1} parent=1 // pred_check
      _
    $region19: #{tpu_custom_call.1} parent=1 // pred_check_branch
      %43 = sbr.rel (0) target = $region21
    $region20: #{tpu_custom_call.1} parent=1 // pred_region
      _
    $region21: #{tpu_custom_call.1} parent=1 // pred_fallthru
      _
    // Predicated region
    $region22: #{tpu_custom_call.1} parent=1 // pred_check
      _
    $region23: #{tpu_custom_call.1} parent=1 // pred_check_branch
      %45 = sbr.rel (0) target = $region25
    $region24: #{tpu_custom_call.1} parent=1 // pred_region
      _
    $region25: #{tpu_custom_call.1} parent=1 // pred_fallthru
      _
    // Predicated region
    $region26: #{tpu_custom_call.1} parent=1 // pred_check
      _
    $region27: #{tpu_custom_call.1} parent=1 // pred_check_branch
      %47 = sbr.rel (0) target = $region29
    $region28: #{tpu_custom_call.1} parent=1 // pred_region
      %48 = dma.done [#allocation5], 256
    $region29: #{tpu_custom_call.1} parent=1 // pred_fallthru
      _
    // Predicated region
    $region30: #{tpu_custom_call.1} parent=1 // pred_check
      _
    $region31: #{tpu_custom_call.1} parent=1 // pred_check_branch
      %50 = sbr.rel (0) target = $region33
    $region32: #{tpu_custom_call.1} parent=1 // pred_region
      %51 = dma.done [#allocation8], 2048
    $region33: #{tpu_custom_call.1} parent=1 // pred_fallthru
      _
    %v52 = vld [vmem:[#allocation4] sm:$0x3]
    %v53 = vld [vmem:[#allocation4 + $0x2] sm:$0x3]
    %v54 = vld [vmem:[#allocation4 + $0x4] sm:$0x3]
    %v55 = vld [vmem:[#allocation4 + $0x6] sm:$0x3]
    %v56 = vld [vmem:[#allocation4 + $0x8] sm:$0x3]
    %v57 = vld [vmem:[#allocation4 + $0xa] sm:$0x3]
    %v58 = vld [vmem:[#allocation4 + $0xc] sm:$0x3]
    %v59 = vld [vmem:[#allocation4 + $0xe] sm:$0x3]
    %v60 = vld [vmem:[%s1] sm:$0xff]
    %v61 = vld [vmem:[%s1 + $0x8] sm:$0xff]
    %v62 = vld [vmem:[%s1 + $0x10] sm:$0xff]
    %v63 = vld [vmem:[%s1 + $0x18] sm:$0xff]
    %v64 = vld [vmem:[%s1 + $0x20] sm:$0xff]
    %v65 = vld [vmem:[%s1 + $0x28] sm:$0xff]
    %v66 = vld [vmem:[%s1 + $0x30] sm:$0xff]
    %v67 = vld [vmem:[%s1 + $0x38] sm:$0xff]
    %v68 = vld [vmem:[%s3] sm:$0x3]
    %v70 = vlaneseq
    %v71 = vshrl.u32 %v70, 7
    %v72 = vsub.s32 0, %v71
    %v73 = vrot.slane %v68, %v72
    %v74 = vlaneseq
    %v75 = vshrl.u32 %v74, 7
    %v76 = vsub.s32 1, %v75
    %v77 = vrot.slane %v68, %v76
    %v88 = vcombine.low %v52, %v53
    %v89 = vcombine.low %v54, %v55
    %v91 = vunpack.c.l.s4 1983009808
    %v92 = vunpack.c.0.s8 %v91
    %v93 = vlaneseq
    %v94 = vshrl.u32 %v93, 7
    %v95 = vsub.s32 %v92, %v94
    %v96 = vrot.slane %v88, %v95
    %v98 = vunpack.c.l.s4 1983009808
    %v99 = vunpack.c.0.s8 %v98
    %v100 = vlaneseq
    %v101 = vshrl.u32 %v100, 7
    %v102 = vsub.s32 %v99, %v101
    %v103 = vrot.slane %v89, %v102
    %v104 = vcombine.low %v96, %v103
    %v105 = vcombine.low %v56, %v57
    %v106 = vcombine.low %v58, %v59
    %v108 = vunpack.c.l.s4 1983009808
    %v109 = vunpack.c.0.s8 %v108
    %v110 = vlaneseq
    %v111 = vshrl.u32 %v110, 7
    %v112 = vsub.s32 %v109, %v111
    %v113 = vrot.slane %v105, %v112
    %v115 = vunpack.c.l.s4 1983009808
    %v116 = vunpack.c.0.s8 %v115
    %v117 = vlaneseq
    %v118 = vshrl.u32 %v117, 7
    %v119 = vsub.s32 %v116, %v118
    %v120 = vrot.slane %v106, %v119
    %v121 = vcombine.low %v113, %v120
    %vm122 = vcmask 261120
    %v123 = vsel %vm122, %v104, 0
    %v125 = vsel %vm122, %v121, 0
    %127 = vmatprep.subr.mxu0 0.0
    %128 = vmatpush1.msra.mxu0 0.0
    %129 = vmatprep.subr.mxu0 0.0
    %130 = vmatpush1.msra.mxu0 0.0
    %131 = vmatprep.subr.mxu0 0.0
    %132 = vmatpush1.msra.mxu0 0.0
    %133 = vmatprep.subr.mxu0 0.0
    %134 = vmatpush1.msra.mxu0 0.0
    %135 = vmatprep.subr.mxu0 0.0
    %136 = vmatpush1.msra.mxu0 0.0
    %137 = vmatprep.subr.mxu0 0.0
    %138 = vmatpush1.msra.mxu0 0.0
    %139 = vmatprep.subr.mxu0 0.0
    %140 = vmatpush1.msra.mxu0 0.0
    %141 = vmatprep.subr.mxu0 0.0
    %142 = vmatpush1.msra.mxu0 0.0
    %143 = vmatprep.subr.mxu0 0.0
    %144 = vmatpush1.msra.mxu0 0.0
    %145 = vmatprep.subr.mxu0 0.0
    %146 = vmatpush1.msra.mxu0 0.0
    %147 = vmatprep.subr.mxu0 0.0
    %148 = vmatpush1.msra.mxu0 0.0
    %149 = vmatprep.subr.mxu0 0.0
    %150 = vmatpush1.msra.mxu0 0.0
    %151 = vmatprep.subr.mxu0 %v67
    %152 = vmatpush1.msra.mxu0 %v66
    %153 = vmatprep.subr.mxu0 %v65
    %154 = vmatpush1.msra.mxu0 %v64
    %155 = vmatprep.subr.mxu0 %v63
    %156 = vmatpush1.msra.mxu0 %v62
    %157 = vmatprep.subr.mxu0 %v61
    %158 = vmatpush1.msra.mxu0 %v60
    %159 = vmatprep.subr.mxu0 0.0
    %160 = vmatpush2.msra.mxu0 0.0
    %161 = vmatprep.subr.mxu0 0.0
    %162 = vmatpush2.msra.mxu0 0.0
    %163 = vmatprep.subr.mxu0 0.0
    %164 = vmatpush2.msra.mxu0 0.0
    %165 = vmatprep.subr.mxu0 0.0
    %166 = vmatpush2.msra.mxu0 0.0
    %167 = vmatprep.subr.mxu0 0.0
    %168 = vmatpush2.msra.mxu0 0.0
    %169 = vmatprep.subr.mxu0 0.0
    %170 = vmatpush2.msra.mxu0 0.0
    %171 = vmatprep.subr.mxu0 0.0
    %172 = vmatpush2.msra.mxu0 0.0
    %173 = vmatprep.subr.mxu0 0.0
    %174 = vmatpush2.msra.mxu0 0.0
    %175 = vmatprep.subr.mxu0 0.0
    %176 = vmatpush2.msra.mxu0 0.0
    %177 = vmatprep.subr.mxu0 0.0
    %178 = vmatpush2.msra.mxu0 0.0
    %179 = vmatprep.subr.mxu0 0.0
    %180 = vmatpush2.msra.mxu0 0.0
    %181 = vmatprep.subr.mxu0 0.0
    %182 = vmatpush2.msra.mxu0 0.0
    %183 = vmatprep.subr.mxu0 0.0
    %184 = vmatpush2.msra.mxu0 0.0
    %185 = vmatprep.subr.mxu0 0.0
    %186 = vmatpush2.msra.mxu0 0.0
    %187 = vmatprep.subr.mxu0 0.0
    %188 = vmatpush2.msra.mxu0 0.0
    %189 = vmatprep.subr.mxu0 0.0
    %190 = vmatpush2.msra.mxu0 0.0
    %191 = vmatprep.mubr.f32.mxu0 0.0
    %192 = vmatmul.mubr.f32.gmra.mxu0 %v123
    %v193 = vpop.f32.mrf.mxu0
    %v194 = vadd.f32 %v73, %v193
    %v195 = vpop.f32.mrf.mxu0
    %v196 = vadd.f32 %v77, %v195
    %197 = vmatprep.mubr.f32.mxu0 0.0
    %198 = vmatmul.mubr.f32.gmra.mxu0 %v125
    %v199 = vpop.f32.mrf.mxu0
    %v200 = vadd.f32 %v73, %v199
    %v201 = vpop.f32.mrf.mxu0
    %v202 = vadd.f32 %v77, %v201
    %203 = vdwg.mxu0
    %v204 = vld [vmem:[#allocation7] sm:$0xff]
    %v205 = vld [vmem:[#allocation7 + $0x8] sm:$0xff]
    %v206 = vld [vmem:[#allocation7 + $0x10] sm:$0xff]
    %v207 = vld [vmem:[#allocation7 + $0x18] sm:$0xff]
    %v208 = vld [vmem:[#allocation7 + $0x20] sm:$0xff]
    %v209 = vld [vmem:[#allocation7 + $0x28] sm:$0xff]
    %v210 = vld [vmem:[#allocation7 + $0x30] sm:$0xff]
    %v211 = vld [vmem:[#allocation7 + $0x38] sm:$0xff]
    %v212 = vld [vmem:[#allocation7 + $0x40] sm:$0xff]
    %v213 = vld [vmem:[#allocation7 + $0x48] sm:$0xff]
    %v214 = vld [vmem:[#allocation7 + $0x50] sm:$0xff]
    %v215 = vld [vmem:[#allocation7 + $0x58] sm:$0xff]
    %v216 = vld [vmem:[#allocation7 + $0x60] sm:$0xff]
    %v217 = vld [vmem:[#allocation7 + $0x68] sm:$0xff]
    %v218 = vld [vmem:[#allocation7 + $0x70] sm:$0xff]
    %v219 = vld [vmem:[#allocation7 + $0x78] sm:$0xff]
    %vm220 = vcmask 523264
    %v222 = vsel %vm220, 0.0, 0
    %224 = vmatprep.subr.mxu0 0.0
    %225 = vmatpush1.msra.mxu0 0.0
    %226 = vmatprep.subr.mxu0 0.0
    %227 = vmatpush1.msra.mxu0 0.0
    %228 = vmatprep.subr.mxu0 0.0
    %229 = vmatpush1.msra.mxu0 0.0
    %230 = vmatprep.subr.mxu0 0.0
    %231 = vmatpush1.msra.mxu0 0.0
    %232 = vmatprep.subr.mxu0 0.0
    %233 = vmatpush1.msra.mxu0 0.0
    %234 = vmatprep.subr.mxu0 0.0
    %235 = vmatpush1.msra.mxu0 0.0
    %236 = vmatprep.subr.mxu0 0.0
    %237 = vmatpush1.msra.mxu0 0.0
    %238 = vmatprep.subr.mxu0 0.0
    %239 = vmatpush1.msra.mxu0 0.0
    %240 = vmatprep.subr.mxu0 %v219
    %241 = vmatpush1.msra.mxu0 %v218
    %242 = vmatprep.subr.mxu0 %v217
    %243 = vmatpush1.msra.mxu0 %v216
    %244 = vmatprep.subr.mxu0 %v215
    %245 = vmatpush1.msra.mxu0 %v214
    %246 = vmatprep.subr.mxu0 %v213
    %247 = vmatpush1.msra.mxu0 %v212
    %248 = vmatprep.subr.mxu0 %v211
    %249 = vmatpush1.msra.mxu0 %v210
    %250 = vmatprep.subr.mxu0 %v209
    %251 = vmatpush1.msra.mxu0 %v208
    %252 = vmatprep.subr.mxu0 %v207
    %253 = vmatpush1.msra.mxu0 %v206
    %254 = vmatprep.subr.mxu0 %v205
    %255 = vmatpush1.msra.mxu0 %v204
    %256 = vmatprep.subr.mxu0 0.0
    %257 = vmatpush2.msra.mxu0 0.0
    %258 = vmatprep.subr.mxu0 0.0
    %259 = vmatpush2.msra.mxu0 0.0
    %260 = vmatprep.subr.mxu0 0.0
    %261 = vmatpush2.msra.mxu0 0.0
    %262 = vmatprep.subr.mxu0 0.0
    %263 = vmatpush2.msra.mxu0 0.0
    %264 = vmatprep.subr.mxu0 0.0
    %265 = vmatpush2.msra.mxu0 0.0
    %266 = vmatprep.subr.mxu0 0.0
    %267 = vmatpush2.msra.mxu0 0.0
    %268 = vmatprep.subr.mxu0 0.0
    %269 = vmatpush2.msra.mxu0 0.0
    %270 = vmatprep.subr.mxu0 0.0
    %271 = vmatpush2.msra.mxu0 0.0
    %272 = vmatprep.subr.mxu0 0.0
    %273 = vmatpush2.msra.mxu0 0.0
    %274 = vmatprep.subr.mxu0 0.0
    %275 = vmatpush2.msra.mxu0 0.0
    %276 = vmatprep.subr.mxu0 0.0
    %277 = vmatpush2.msra.mxu0 0.0
    %278 = vmatprep.subr.mxu0 0.0
    %279 = vmatpush2.msra.mxu0 0.0
    %280 = vmatprep.subr.mxu0 0.0
    %281 = vmatpush2.msra.mxu0 0.0
    %282 = vmatprep.subr.mxu0 0.0
    %283 = vmatpush2.msra.mxu0 0.0
    %284 = vmatprep.subr.mxu0 0.0
    %285 = vmatpush2.msra.mxu0 0.0
    %286 = vmatprep.subr.mxu0 0.0
    %287 = vmatpush2.msra.mxu0 0.0
    %288 = vmatprep.mubr.f32.mxu0 0.0
    %289 = vmatmul.mubr.f32.gmra.mxu0 %v222
    %v290 = vpop.f32.mrf.mxu0
    %v291 = vadd.f32 0.0, %v290
    %v292 = vpop.f32.mrf.mxu0
    %v293 = vadd.f32 0.0, %v292
    %294 = vdwg.mxu0
    %v295 = vadd.f32 %v194, %v291
    %v296 = vadd.f32 %v196, %v293
    %v297 = vxor.u32 %v295, 2147483648
    %v298 = vmul.f32 %v297, 1.442695
    %v299 = vpow.pop %v298
    %v300 = vadd.f32 %v299, 1.0
    %v301 = vrcp.pop %v300
    %v302 = vmul.f32 1.0, %v301
    %v303 = vtanh.pop %v296
    %v304 = vxor.u32 %v296, 2147483648
    %v305 = vmul.f32 %v304, 1.442695
    %v306 = vpow.pop %v305
    %v307 = vadd.f32 %v306, 1.0
    %v308 = vrcp.pop %v307
    %v309 = vmul.f32 1.0, %v308
    %v310 = vmul.f32 %v302, 0.0
    %v311 = vmul.f32 %v302, %v303
    %313 = vrot.lane.b32.xlu0 %v311, 64
    %v314 = vpop.permute.xlu0 %313
    %v316 = vadd.f32 %v310, %v314
    %v317 = vtanh.pop %v316
    %v318 = vmul.f32 %v309, %v317
    %320 = vrot.lane.b32.xlu0 %v318, 64
    %v321 = vpop.permute.xlu0 %320
    %vm323 = vcmask 254976
    %324 = vst.msk [vmem:[#allocation2] sm:$0x3] %vm323, %v321
    %325 = vrot.lane.b32.xlu0 %v318, 32
    %v326 = vpop.permute.xlu0 %325
    %s328 = scalar_lea.vmem [#allocation3], 14
    %329 = vst.msk [vmem:[%s328] sm:$0x3] %vm323, %v326
    %v330 = vsel %vm220, %v321, 0
    %332 = vmatprep.subr.mxu0 0.0
    %333 = vmatpush1.msra.mxu0 0.0
    %334 = vmatprep.subr.mxu0 0.0
    %335 = vmatpush1.msra.mxu0 0.0
    %336 = vmatprep.subr.mxu0 0.0
    %337 = vmatpush1.msra.mxu0 0.0
    %338 = vmatprep.subr.mxu0 0.0
    %339 = vmatpush1.msra.mxu0 0.0
    %340 = vmatprep.subr.mxu0 0.0
    %341 = vmatpush1.msra.mxu0 0.0
    %342 = vmatprep.subr.mxu0 0.0
    %343 = vmatpush1.msra.mxu0 0.0
    %344 = vmatprep.subr.mxu0 0.0
    %345 = vmatpush1.msra.mxu0 0.0
    %346 = vmatprep.subr.mxu0 0.0
    %347 = vmatpush1.msra.mxu0 0.0
    %348 = vmatprep.subr.mxu0 %v219
    %349 = vmatpush1.msra.mxu0 %v218
    %350 = vmatprep.subr.mxu0 %v217
    %351 = vmatpush1.msra.mxu0 %v216
    %352 = vmatprep.subr.mxu0 %v215
    %353 = vmatpush1.msra.mxu0 %v214
    %354 = vmatprep.subr.mxu0 %v213
    %355 = vmatpush1.msra.mxu0 %v212
    %356 = vmatprep.subr.mxu0 %v211
    %357 = vmatpush1.msra.mxu0 %v210
    %358 = vmatprep.subr.mxu0 %v209
    %359 = vmatpush1.msra.mxu0 %v208
    %360 = vmatprep.subr.mxu0 %v207
    %361 = vmatpush1.msra.mxu0 %v206
    %362 = vmatprep.subr.mxu0 %v205
    %363 = vmatpush1.msra.mxu0 %v204
    %364 = vmatprep.subr.mxu0 0.0
    %365 = vmatpush2.msra.mxu0 0.0
    %366 = vmatprep.subr.mxu0 0.0
    %367 = vmatpush2.msra.mxu0 0.0
    %368 = vmatprep.subr.mxu0 0.0
    %369 = vmatpush2.msra.mxu0 0.0
    %370 = vmatprep.subr.mxu0 0.0
    %371 = vmatpush2.msra.mxu0 0.0
    %372 = vmatprep.subr.mxu0 0.0
    %373 = vmatpush2.msra.mxu0 0.0
    %374 = vmatprep.subr.mxu0 0.0
    %375 = vmatpush2.msra.mxu0 0.0
    %376 = vmatprep.subr.mxu0 0.0
    %377 = vmatpush2.msra.mxu0 0.0
    %378 = vmatprep.subr.mxu0 0.0
    %379 = vmatpush2.msra.mxu0 0.0
    %380 = vmatprep.subr.mxu0 0.0
    %381 = vmatpush2.msra.mxu0 0.0
    %382 = vmatprep.subr.mxu0 0.0
    %383 = vmatpush2.msra.mxu0 0.0
    %384 = vmatprep.subr.mxu0 0.0
    %385 = vmatpush2.msra.mxu0 0.0
    %386 = vmatprep.subr.mxu0 0.0
    %387 = vmatpush2.msra.mxu0 0.0
    %388 = vmatprep.subr.mxu0 0.0
    %389 = vmatpush2.msra.mxu0 0.0
    %390 = vmatprep.subr.mxu0 0.0
    %391 = vmatpush2.msra.mxu0 0.0
    %392 = vmatprep.subr.mxu0 0.0
    %393 = vmatpush2.msra.mxu0 0.0
    %394 = vmatprep.subr.mxu0 0.0
    %395 = vmatpush2.msra.mxu0 0.0
    %396 = vmatprep.mubr.f32.mxu0 0.0
    %397 = vmatmul.mubr.f32.gmra.mxu0 %v330
    %v398 = vpop.f32.mrf.mxu0
    %v399 = vadd.f32 0.0, %v398
    %v400 = vpop.f32.mrf.mxu0
    %v401 = vadd.f32 0.0, %v400
    %402 = vdwg.mxu0
    %v405 = vrot.slane %v399, 6
    %v406 = vrot.slane %v401, 6
    %v409 = vadd.f32 %v194, %v405
    %v410 = vadd.f32 %v196, %v406
    %v411 = vxor.u32 %v409, 2147483648
    %v412 = vmul.f32 %v411, 1.442695
    %v413 = vpow.pop %v412
    %v414 = vadd.f32 %v413, 1.0
    %v415 = vrcp.pop %v414
    %v416 = vmul.f32 1.0, %v415
    %v417 = vtanh.pop %v410
    %v418 = vxor.u32 %v410, 2147483648
    %v419 = vmul.f32 %v418, 1.442695
    %v420 = vpow.pop %v419
    %v421 = vadd.f32 %v420, 1.0
    %v422 = vrcp.pop %v421
    %v423 = vmul.f32 1.0, %v422
    %v425 = vrot.slane %v316, 6
    %v427 = vmul.f32 %v416, %v425
    %v428 = vmul.f32 %v416, %v417
    %430 = vrot.lane.b32.xlu0 %v428, 64
    %v431 = vpop.permute.xlu0 %430
    %v433 = vadd.f32 %v427, %v431
    %v434 = vtanh.pop %v433
    %v435 = vmul.f32 %v423, %v434
    %437 = vrot.lane.b32.xlu0 %v435, 64
    %v438 = vpop.permute.xlu0 %437
    %s440 = scalar_lea.vmem [#allocation2], 2
    %vm441 = vcmask 257026
    %442 = vst.msk [vmem:[%s440 - $0x2] sm:$0xc] %vm441, %v438
    %443 = vrot.lane.b32.xlu0 %v435, 32
    %v444 = vpop.permute.xlu0 %443
    %s446 = scalar_lea.vmem [#allocation3], 12
    %447 = vst.msk [vmem:[%s446 - $0x2] sm:$0xc] %vm441, %v444
    %v448 = vrot.slane %v435, 2
    %449 = vrot.lane.b32.xlu0 %v448, 64
    %v450 = vpop.permute.xlu0 %449
    %v451 = vsel %vm220, %v450, 0
    %453 = vmatprep.subr.mxu0 0.0
    %454 = vmatpush1.msra.mxu0 0.0
    %455 = vmatprep.subr.mxu0 0.0
    %456 = vmatpush1.msra.mxu0 0.0
    %457 = vmatprep.subr.mxu0 0.0
    %458 = vmatpush1.msra.mxu0 0.0
    %459 = vmatprep.subr.mxu0 0.0
    %460 = vmatpush1.msra.mxu0 0.0
    %461 = vmatprep.subr.mxu0 0.0
    %462 = vmatpush1.msra.mxu0 0.0
    %463 = vmatprep.subr.mxu0 0.0
    %464 = vmatpush1.msra.mxu0 0.0
    %465 = vmatprep.subr.mxu0 0.0
    %466 = vmatpush1.msra.mxu0 0.0
    %467 = vmatprep.subr.mxu0 0.0
    %468 = vmatpush1.msra.mxu0 0.0
    %469 = vmatprep.subr.mxu0 %v219
    %470 = vmatpush1.msra.mxu0 %v218
    %471 = vmatprep.subr.mxu0 %v217
    %472 = vmatpush1.msra.mxu0 %v216
    %473 = vmatprep.subr.mxu0 %v215
    %474 = vmatpush1.msra.mxu0 %v214
    %475 = vmatprep.subr.mxu0 %v213
    %476 = vmatpush1.msra.mxu0 %v212
    %477 = vmatprep.subr.mxu0 %v211
    %478 = vmatpush1.msra.mxu0 %v210
    %479 = vmatprep.subr.mxu0 %v209
    %480 = vmatpush1.msra.mxu0 %v208
    %481 = vmatprep.subr.mxu0 %v207
    %482 = vmatpush1.msra.mxu0 %v206
    %483 = vmatprep.subr.mxu0 %v205
    %484 = vmatpush1.msra.mxu0 %v204
    %485 = vmatprep.subr.mxu0 0.0
    %486 = vmatpush2.msra.mxu0 0.0
    %487 = vmatprep.subr.mxu0 0.0
    %488 = vmatpush2.msra.mxu0 0.0
    %489 = vmatprep.subr.mxu0 0.0
    %490 = vmatpush2.msra.mxu0 0.0
    %491 = vmatprep.subr.mxu0 0.0
    %492 = vmatpush2.msra.mxu0 0.0
    %493 = vmatprep.subr.mxu0 0.0
    %494 = vmatpush2.msra.mxu0 0.0
    %495 = vmatprep.subr.mxu0 0.0
    %496 = vmatpush2.msra.mxu0 0.0
    %497 = vmatprep.subr.mxu0 0.0
    %498 = vmatpush2.msra.mxu0 0.0
    %499 = vmatprep.subr.mxu0 0.0
    %500 = vmatpush2.msra.mxu0 0.0
    %501 = vmatprep.subr.mxu0 0.0
    %502 = vmatpush2.msra.mxu0 0.0
    %503 = vmatprep.subr.mxu0 0.0
    %504 = vmatpush2.msra.mxu0 0.0
    %505 = vmatprep.subr.mxu0 0.0
    %506 = vmatpush2.msra.mxu0 0.0
    %507 = vmatprep.subr.mxu0 0.0
    %508 = vmatpush2.msra.mxu0 0.0
    %509 = vmatprep.subr.mxu0 0.0
    %510 = vmatpush2.msra.mxu0 0.0
    %511 = vmatprep.subr.mxu0 0.0
    %512 = vmatpush2.msra.mxu0 0.0
    %513 = vmatprep.subr.mxu0 0.0
    %514 = vmatpush2.msra.mxu0 0.0
    %515 = vmatprep.subr.mxu0 0.0
    %516 = vmatpush2.msra.mxu0 0.0
    %517 = vmatprep.mubr.f32.mxu0 0.0
    %518 = vmatmul.mubr.f32.gmra.mxu0 %v451
    %v519 = vpop.f32.mrf.mxu0
    %v520 = vadd.f32 0.0, %v519
    %v521 = vpop.f32.mrf.mxu0
    %v522 = vadd.f32 0.0, %v521
    %523 = vdwg.mxu0
    %v526 = vrot.slane %v520, 4
    %v527 = vrot.slane %v522, 4
    %v530 = vadd.f32 %v194, %v526
    %v531 = vadd.f32 %v196, %v527
    %v532 = vxor.u32 %v530, 2147483648
    %v533 = vmul.f32 %v532, 1.442695
    %v534 = vpow.pop %v533
    %v535 = vadd.f32 %v534, 1.0
    %v536 = vrcp.pop %v535
    %v537 = vmul.f32 1.0, %v536
    %v538 = vtanh.pop %v531
    %v539 = vxor.u32 %v531, 2147483648
    %v540 = vmul.f32 %v539, 1.442695
    %v541 = vpow.pop %v540
    %v542 = vadd.f32 %v541, 1.0
    %v543 = vrcp.pop %v542
    %v544 = vmul.f32 1.0, %v543
    %v546 = vrot.slane %v433, 6
    %v548 = vmul.f32 %v537, %v546
    %v549 = vmul.f32 %v537, %v538
    %551 = vrot.lane.b32.xlu0 %v549, 64
    %v552 = vpop.permute.xlu0 %551
    %v554 = vadd.f32 %v548, %v552
    %v555 = vtanh.pop %v554
    %v556 = vmul.f32 %v544, %v555
    %558 = vrot.lane.b32.xlu0 %v556, 64
    %v559 = vpop.permute.xlu0 %558
    %s561 = scalar_lea.vmem [#allocation2], 4
    %vm562 = vcmask 259076
    %563 = vst.msk [vmem:[%s561 - $0x4] sm:$0x30] %vm562, %v559
    %564 = vrot.lane.b32.xlu0 %v556, 32
    %v565 = vpop.permute.xlu0 %564
    %s567 = scalar_lea.vmem [#allocation3], 10
    %568 = vst.msk [vmem:[%s567 - $0x4] sm:$0x30] %vm562, %v565
    %v569 = vrot.slane %v556, 4
    %570 = vrot.lane.b32.xlu0 %v569, 64
    %v571 = vpop.permute.xlu0 %570
    %v572 = vsel %vm220, %v571, 0
    %574 = vmatprep.subr.mxu0 0.0
    %575 = vmatpush1.msra.mxu0 0.0
    %576 = vmatprep.subr.mxu0 0.0
    %577 = vmatpush1.msra.mxu0 0.0
    %578 = vmatprep.subr.mxu0 0.0
    %579 = vmatpush1.msra.mxu0 0.0
    %580 = vmatprep.subr.mxu0 0.0
    %581 = vmatpush1.msra.mxu0 0.0
    %582 = vmatprep.subr.mxu0 0.0
    %583 = vmatpush1.msra.mxu0 0.0
    %584 = vmatprep.subr.mxu0 0.0
    %585 = vmatpush1.msra.mxu0 0.0
    %586 = vmatprep.subr.mxu0 0.0
    %587 = vmatpush1.msra.mxu0 0.0
    %588 = vmatprep.subr.mxu0 0.0
    %589 = vmatpush1.msra.mxu0 0.0
    %590 = vmatprep.subr.mxu0 %v219
    %591 = vmatpush1.msra.mxu0 %v218
    %592 = vmatprep.subr.mxu0 %v217
    %593 = vmatpush1.msra.mxu0 %v216
    %594 = vmatprep.subr.mxu0 %v215
    %595 = vmatpush1.msra.mxu0 %v214
    %596 = vmatprep.subr.mxu0 %v213
    %597 = vmatpush1.msra.mxu0 %v212
    %598 = vmatprep.subr.mxu0 %v211
    %599 = vmatpush1.msra.mxu0 %v210
    %600 = vmatprep.subr.mxu0 %v209
    %601 = vmatpush1.msra.mxu0 %v208
    %602 = vmatprep.subr.mxu0 %v207
    %603 = vmatpush1.msra.mxu0 %v206
    %604 = vmatprep.subr.mxu0 %v205
    %605 = vmatpush1.msra.mxu0 %v204
    %606 = vmatprep.subr.mxu0 0.0
    %607 = vmatpush2.msra.mxu0 0.0
    %608 = vmatprep.subr.mxu0 0.0
    %609 = vmatpush2.msra.mxu0 0.0
    %610 = vmatprep.subr.mxu0 0.0
    %611 = vmatpush2.msra.mxu0 0.0
    %612 = vmatprep.subr.mxu0 0.0
    %613 = vmatpush2.msra.mxu0 0.0
    %614 = vmatprep.subr.mxu0 0.0
    %615 = vmatpush2.msra.mxu0 0.0
    %616 = vmatprep.subr.mxu0 0.0
    %617 = vmatpush2.msra.mxu0 0.0
    %618 = vmatprep.subr.mxu0 0.0
    %619 = vmatpush2.msra.mxu0 0.0
    %620 = vmatprep.subr.mxu0 0.0
    %621 = vmatpush2.msra.mxu0 0.0
    %622 = vmatprep.subr.mxu0 0.0
    %623 = vmatpush2.msra.mxu0 0.0
    %624 = vmatprep.subr.mxu0 0.0
    %625 = vmatpush2.msra.mxu0 0.0
    %626 = vmatprep.subr.mxu0 0.0
    %627 = vmatpush2.msra.mxu0 0.0
    %628 = vmatprep.subr.mxu0 0.0
    %629 = vmatpush2.msra.mxu0 0.0
    %630 = vmatprep.subr.mxu0 0.0
    %631 = vmatpush2.msra.mxu0 0.0
    %632 = vmatprep.subr.mxu0 0.0
    %633 = vmatpush2.msra.mxu0 0.0
    %634 = vmatprep.subr.mxu0 0.0
    %635 = vmatpush2.msra.mxu0 0.0
    %636 = vmatprep.subr.mxu0 0.0
    %637 = vmatpush2.msra.mxu0 0.0
    %638 = vmatprep.mubr.f32.mxu0 0.0
    %639 = vmatmul.mubr.f32.gmra.mxu0 %v572
    %v640 = vpop.f32.mrf.mxu0
    %v641 = vadd.f32 0.0, %v640
    %v642 = vpop.f32.mrf.mxu0
    %v643 = vadd.f32 0.0, %v642
    %644 = vdwg.mxu0
    %v647 = vrot.slane %v641, 2
    %v648 = vrot.slane %v643, 2
    %v651 = vadd.f32 %v194, %v647
    %v652 = vadd.f32 %v196, %v648
    %v653 = vxor.u32 %v651, 2147483648
    %v654 = vmul.f32 %v653, 1.442695
    %v655 = vpow.pop %v654
    %v656 = vadd.f32 %v655, 1.0
    %v657 = vrcp.pop %v656
    %v658 = vmul.f32 1.0, %v657
    %v659 = vtanh.pop %v652
    %v660 = vxor.u32 %v652, 2147483648
    %v661 = vmul.f32 %v660, 1.442695
    %v662 = vpow.pop %v661
    %v663 = vadd.f32 %v662, 1.0
    %v664 = vrcp.pop %v663
    %v665 = vmul.f32 1.0, %v664
    %v667 = vrot.slane %v554, 6
    %v669 = vmul.f32 %v658, %v667
    %v670 = vmul.f32 %v658, %v659
    %672 = vrot.lane.b32.xlu0 %v670, 64
    %v673 = vpop.permute.xlu0 %672
    %v675 = vadd.f32 %v669, %v673
    %v676 = vtanh.pop %v675
    %v677 = vmul.f32 %v665, %v676
    %679 = vrot.lane.b32.xlu0 %v677, 64
    %v680 = vpop.permute.xlu0 %679
    %s682 = scalar_lea.vmem [#allocation2], 6
    %vm683 = vcmask 261126
    %684 = vst.msk [vmem:[%s682 - $0x6] sm:$0xc0] %vm683, %v680
    %685 = vrot.lane.b32.xlu0 %v677, 32
    %v686 = vpop.permute.xlu0 %685
    %s688 = scalar_lea.vmem [#allocation3], 8
    %689 = vst.msk [vmem:[%s688 - $0x6] sm:$0xc0] %vm683, %v686
    %v690 = vrot.slane %v677, 6
    %691 = vrot.lane.b32.xlu0 %v690, 64
    %v692 = vpop.permute.xlu0 %691
    %v693 = vsel %vm220, %v692, 0
    %695 = vmatprep.subr.mxu0 0.0
    %696 = vmatpush1.msra.mxu0 0.0
    %697 = vmatprep.subr.mxu0 0.0
    %698 = vmatpush1.msra.mxu0 0.0
    %699 = vmatprep.subr.mxu0 0.0
    %700 = vmatpush1.msra.mxu0 0.0
    %701 = vmatprep.subr.mxu0 0.0
    %702 = vmatpush1.msra.mxu0 0.0
    %703 = vmatprep.subr.mxu0 0.0
    %704 = vmatpush1.msra.mxu0 0.0
    %705 = vmatprep.subr.mxu0 0.0
    %706 = vmatpush1.msra.mxu0 0.0
    %707 = vmatprep.subr.mxu0 0.0
    %708 = vmatpush1.msra.mxu0 0.0
    %709 = vmatprep.subr.mxu0 0.0
    %710 = vmatpush1.msra.mxu0 0.0
    %711 = vmatprep.subr.mxu0 %v219
    %712 = vmatpush1.msra.mxu0 %v218
    %713 = vmatprep.subr.mxu0 %v217
    %714 = vmatpush1.msra.mxu0 %v216
    %715 = vmatprep.subr.mxu0 %v215
    %716 = vmatpush1.msra.mxu0 %v214
    %717 = vmatprep.subr.mxu0 %v213
    %718 = vmatpush1.msra.mxu0 %v212
    %719 = vmatprep.subr.mxu0 %v211
    %720 = vmatpush1.msra.mxu0 %v210
    %721 = vmatprep.subr.mxu0 %v209
    %722 = vmatpush1.msra.mxu0 %v208
    %723 = vmatprep.subr.mxu0 %v207
    %724 = vmatpush1.msra.mxu0 %v206
    %725 = vmatprep.subr.mxu0 %v205
    %726 = vmatpush1.msra.mxu0 %v204
    %727 = vmatprep.subr.mxu0 0.0
    %728 = vmatpush2.msra.mxu0 0.0
    %729 = vmatprep.subr.mxu0 0.0
    %730 = vmatpush2.msra.mxu0 0.0
    %731 = vmatprep.subr.mxu0 0.0
    %732 = vmatpush2.msra.mxu0 0.0
    %733 = vmatprep.subr.mxu0 0.0
    %734 = vmatpush2.msra.mxu0 0.0
    %735 = vmatprep.subr.mxu0 0.0
    %736 = vmatpush2.msra.mxu0 0.0
    %737 = vmatprep.subr.mxu0 0.0
    %738 = vmatpush2.msra.mxu0 0.0
    %739 = vmatprep.subr.mxu0 0.0
    %740 = vmatpush2.msra.mxu0 0.0
    %741 = vmatprep.subr.mxu0 0.0
    %742 = vmatpush2.msra.mxu0 0.0
    %743 = vmatprep.subr.mxu0 0.0
    %744 = vmatpush2.msra.mxu0 0.0
    %745 = vmatprep.subr.mxu0 0.0
    %746 = vmatpush2.msra.mxu0 0.0
    %747 = vmatprep.subr.mxu0 0.0
    %748 = vmatpush2.msra.mxu0 0.0
    %749 = vmatprep.subr.mxu0 0.0
    %750 = vmatpush2.msra.mxu0 0.0
    %751 = vmatprep.subr.mxu0 0.0
    %752 = vmatpush2.msra.mxu0 0.0
    %753 = vmatprep.subr.mxu0 0.0
    %754 = vmatpush2.msra.mxu0 0.0
    %755 = vmatprep.subr.mxu0 0.0
    %756 = vmatpush2.msra.mxu0 0.0
    %757 = vmatprep.subr.mxu0 0.0
    %758 = vmatpush2.msra.mxu0 0.0
    %759 = vmatprep.mubr.f32.mxu0 0.0
    %760 = vmatmul.mubr.f32.gmra.mxu0 %v693
    %v761 = vpop.f32.mrf.mxu0
    %v762 = vadd.f32 0.0, %v761
    %v763 = vpop.f32.mrf.mxu0
    %v764 = vadd.f32 0.0, %v763
    %765 = vdwg.mxu0
    %v766 = vadd.f32 %v200, %v762
    %v767 = vadd.f32 %v202, %v764
    %v768 = vxor.u32 %v766, 2147483648
    %v769 = vmul.f32 %v768, 1.442695
    %v770 = vpow.pop %v769
    %v771 = vadd.f32 %v770, 1.0
    %v772 = vrcp.pop %v771
    %v773 = vmul.f32 1.0, %v772
    %v774 = vtanh.pop %v767
    %v775 = vxor.u32 %v767, 2147483648
    %v776 = vmul.f32 %v775, 1.442695
    %v777 = vpow.pop %v776
    %v778 = vadd.f32 %v777, 1.0
    %v779 = vrcp.pop %v778
    %v780 = vmul.f32 1.0, %v779
    %v782 = vrot.slane %v675, 6
    %v784 = vmul.f32 %v773, %v782
    %v785 = vmul.f32 %v773, %v774
    %787 = vrot.lane.b32.xlu0 %v785, 64
    %v788 = vpop.permute.xlu0 %787
    %v790 = vadd.f32 %v784, %v788
    %v791 = vtanh.pop %v790
    %v792 = vmul.f32 %v780, %v791
    %794 = vrot.lane.b32.xlu0 %v792, 64
    %v795 = vpop.permute.xlu0 %794
    %s797 = scalar_lea.vmem [#allocation2], 8
    %798 = vst.msk [vmem:[%s797] sm:$0x3] %vm323, %v795
    %799 = vrot.lane.b32.xlu0 %v792, 32
    %v800 = vpop.permute.xlu0 %799
    %s802 = scalar_lea.vmem [#allocation3], 6
    %803 = vst.msk [vmem:[%s802] sm:$0x3] %vm323, %v800
    %v804 = vsel %vm220, %v795, 0
    %806 = vmatprep.subr.mxu0 0.0
    %807 = vmatpush1.msra.mxu0 0.0
    %808 = vmatprep.subr.mxu0 0.0
    %809 = vmatpush1.msra.mxu0 0.0
    %810 = vmatprep.subr.mxu0 0.0
    %811 = vmatpush1.msra.mxu0 0.0
    %812 = vmatprep.subr.mxu0 0.0
    %813 = vmatpush1.msra.mxu0 0.0
    %814 = vmatprep.subr.mxu0 0.0
    %815 = vmatpush1.msra.mxu0 0.0
    %816 = vmatprep.subr.mxu0 0.0
    %817 = vmatpush1.msra.mxu0 0.0
    %818 = vmatprep.subr.mxu0 0.0
    %819 = vmatpush1.msra.mxu0 0.0
    %820 = vmatprep.subr.mxu0 0.0
    %821 = vmatpush1.msra.mxu0 0.0
    %822 = vmatprep.subr.mxu0 %v219
    %823 = vmatpush1.msra.mxu0 %v218
    %824 = vmatprep.subr.mxu0 %v217
    %825 = vmatpush1.msra.mxu0 %v216
    %826 = vmatprep.subr.mxu0 %v215
    %827 = vmatpush1.msra.mxu0 %v214
    %828 = vmatprep.subr.mxu0 %v213
    %829 = vmatpush1.msra.mxu0 %v212
    %830 = vmatprep.subr.mxu0 %v211
    %831 = vmatpush1.msra.mxu0 %v210
    %832 = vmatprep.subr.mxu0 %v209
    %833 = vmatpush1.msra.mxu0 %v208
    %834 = vmatprep.subr.mxu0 %v207
    %835 = vmatpush1.msra.mxu0 %v206
    %836 = vmatprep.subr.mxu0 %v205
    %837 = vmatpush1.msra.mxu0 %v204
    %838 = vmatprep.subr.mxu0 0.0
    %839 = vmatpush2.msra.mxu0 0.0
    %840 = vmatprep.subr.mxu0 0.0
    %841 = vmatpush2.msra.mxu0 0.0
    %842 = vmatprep.subr.mxu0 0.0
    %843 = vmatpush2.msra.mxu0 0.0
    %844 = vmatprep.subr.mxu0 0.0
    %845 = vmatpush2.msra.mxu0 0.0
    %846 = vmatprep.subr.mxu0 0.0
    %847 = vmatpush2.msra.mxu0 0.0
    %848 = vmatprep.subr.mxu0 0.0
    %849 = vmatpush2.msra.mxu0 0.0
    %850 = vmatprep.subr.mxu0 0.0
    %851 = vmatpush2.msra.mxu0 0.0
    %852 = vmatprep.subr.mxu0 0.0
    %853 = vmatpush2.msra.mxu0 0.0
    %854 = vmatprep.subr.mxu0 0.0
    %855 = vmatpush2.msra.mxu0 0.0
    %856 = vmatprep.subr.mxu0 0.0
    %857 = vmatpush2.msra.mxu0 0.0
    %858 = vmatprep.subr.mxu0 0.0
    %859 = vmatpush2.msra.mxu0 0.0
    %860 = vmatprep.subr.mxu0 0.0
    %861 = vmatpush2.msra.mxu0 0.0
    %862 = vmatprep.subr.mxu0 0.0
    %863 = vmatpush2.msra.mxu0 0.0
    %864 = vmatprep.subr.mxu0 0.0
    %865 = vmatpush2.msra.mxu0 0.0
    %866 = vmatprep.subr.mxu0 0.0
    %867 = vmatpush2.msra.mxu0 0.0
    %868 = vmatprep.subr.mxu0 0.0
    %869 = vmatpush2.msra.mxu0 0.0
    %870 = vmatprep.mubr.f32.mxu0 0.0
    %871 = vmatmul.mubr.f32.gmra.mxu0 %v804
    %v872 = vpop.f32.mrf.mxu0
    %v873 = vadd.f32 0.0, %v872
    %v874 = vpop.f32.mrf.mxu0
    %v875 = vadd.f32 0.0, %v874
    %876 = vdwg.mxu0
    %v879 = vrot.slane %v873, 6
    %v880 = vrot.slane %v875, 6
    %v883 = vadd.f32 %v200, %v879
    %v884 = vadd.f32 %v202, %v880
    %v885 = vxor.u32 %v883, 2147483648
    %v886 = vmul.f32 %v885, 1.442695
    %v887 = vpow.pop %v886
    %v888 = vadd.f32 %v887, 1.0
    %v889 = vrcp.pop %v888
    %v890 = vmul.f32 1.0, %v889
    %v891 = vtanh.pop %v884
    %v892 = vxor.u32 %v884, 2147483648
    %v893 = vmul.f32 %v892, 1.442695
    %v894 = vpow.pop %v893
    %v895 = vadd.f32 %v894, 1.0
    %v896 = vrcp.pop %v895
    %v897 = vmul.f32 1.0, %v896
    %v899 = vrot.slane %v790, 6
    %v901 = vmul.f32 %v890, %v899
    %v902 = vmul.f32 %v890, %v891
    %904 = vrot.lane.b32.xlu0 %v902, 64
    %v905 = vpop.permute.xlu0 %904
    %v907 = vadd.f32 %v901, %v905
    %v908 = vtanh.pop %v907
    %v909 = vmul.f32 %v897, %v908
    %911 = vrot.lane.b32.xlu0 %v909, 64
    %v912 = vpop.permute.xlu0 %911
    %s914 = scalar_lea.vmem [#allocation2], 10
    %915 = vst.msk [vmem:[%s914 - $0x2] sm:$0xc] %vm441, %v912
    %916 = vrot.lane.b32.xlu0 %v909, 32
    %v917 = vpop.permute.xlu0 %916
    %s919 = scalar_lea.vmem [#allocation3], 4
    %920 = vst.msk [vmem:[%s919 - $0x2] sm:$0xc] %vm441, %v917
    %v921 = vrot.slane %v909, 2
    %922 = vrot.lane.b32.xlu0 %v921, 64
    %v923 = vpop.permute.xlu0 %922
    %v924 = vsel %vm220, %v923, 0
    %926 = vmatprep.subr.mxu0 0.0
    %927 = vmatpush1.msra.mxu0 0.0
    %928 = vmatprep.subr.mxu0 0.0
    %929 = vmatpush1.msra.mxu0 0.0
    %930 = vmatprep.subr.mxu0 0.0
    %931 = vmatpush1.msra.mxu0 0.0
    %932 = vmatprep.subr.mxu0 0.0
    %933 = vmatpush1.msra.mxu0 0.0
    %934 = vmatprep.subr.mxu0 0.0
    %935 = vmatpush1.msra.mxu0 0.0
    %936 = vmatprep.subr.mxu0 0.0
    %937 = vmatpush1.msra.mxu0 0.0
    %938 = vmatprep.subr.mxu0 0.0
    %939 = vmatpush1.msra.mxu0 0.0
    %940 = vmatprep.subr.mxu0 0.0
    %941 = vmatpush1.msra.mxu0 0.0
    %942 = vmatprep.subr.mxu0 %v219
    %943 = vmatpush1.msra.mxu0 %v218
    %944 = vmatprep.subr.mxu0 %v217
    %945 = vmatpush1.msra.mxu0 %v216
    %946 = vmatprep.subr.mxu0 %v215
    %947 = vmatpush1.msra.mxu0 %v214
    %948 = vmatprep.subr.mxu0 %v213
    %949 = vmatpush1.msra.mxu0 %v212
    %950 = vmatprep.subr.mxu0 %v211
    %951 = vmatpush1.msra.mxu0 %v210
    %952 = vmatprep.subr.mxu0 %v209
    %953 = vmatpush1.msra.mxu0 %v208
    %954 = vmatprep.subr.mxu0 %v207
    %955 = vmatpush1.msra.mxu0 %v206
    %956 = vmatprep.subr.mxu0 %v205
    %957 = vmatpush1.msra.mxu0 %v204
    %958 = vmatprep.subr.mxu0 0.0
    %959 = vmatpush2.msra.mxu0 0.0
    %960 = vmatprep.subr.mxu0 0.0
    %961 = vmatpush2.msra.mxu0 0.0
    %962 = vmatprep.subr.mxu0 0.0
    %963 = vmatpush2.msra.mxu0 0.0
    %964 = vmatprep.subr.mxu0 0.0
    %965 = vmatpush2.msra.mxu0 0.0
    %966 = vmatprep.subr.mxu0 0.0
    %967 = vmatpush2.msra.mxu0 0.0
    %968 = vmatprep.subr.mxu0 0.0
    %969 = vmatpush2.msra.mxu0 0.0
    %970 = vmatprep.subr.mxu0 0.0
    %971 = vmatpush2.msra.mxu0 0.0
    %972 = vmatprep.subr.mxu0 0.0
    %973 = vmatpush2.msra.mxu0 0.0
    %974 = vmatprep.subr.mxu0 0.0
    %975 = vmatpush2.msra.mxu0 0.0
    %976 = vmatprep.subr.mxu0 0.0
    %977 = vmatpush2.msra.mxu0 0.0
    %978 = vmatprep.subr.mxu0 0.0
    %979 = vmatpush2.msra.mxu0 0.0
    %980 = vmatprep.subr.mxu0 0.0
    %981 = vmatpush2.msra.mxu0 0.0
    %982 = vmatprep.subr.mxu0 0.0
    %983 = vmatpush2.msra.mxu0 0.0
    %984 = vmatprep.subr.mxu0 0.0
    %985 = vmatpush2.msra.mxu0 0.0
    %986 = vmatprep.subr.mxu0 0.0
    %987 = vmatpush2.msra.mxu0 0.0
    %988 = vmatprep.subr.mxu0 0.0
    %989 = vmatpush2.msra.mxu0 0.0
    %990 = vmatprep.mubr.f32.mxu0 0.0
    %991 = vmatmul.mubr.f32.gmra.mxu0 %v924
    %v992 = vpop.f32.mrf.mxu0
    %v993 = vadd.f32 0.0, %v992
    %v994 = vpop.f32.mrf.mxu0
    %v995 = vadd.f32 0.0, %v994
    %996 = vdwg.mxu0
    %v999 = vrot.slane %v993, 4
    %v1000 = vrot.slane %v995, 4
    %v1003 = vadd.f32 %v200, %v999
    %v1004 = vadd.f32 %v202, %v1000
    %v1005 = vxor.u32 %v1003, 2147483648
    %v1006 = vmul.f32 %v1005, 1.442695
    %v1007 = vpow.pop %v1006
    %v1008 = vadd.f32 %v1007, 1.0
    %v1009 = vrcp.pop %v1008
    %v1010 = vmul.f32 1.0, %v1009
    %v1011 = vtanh.pop %v1004
    %v1012 = vxor.u32 %v1004, 2147483648
    %v1013 = vmul.f32 %v1012, 1.442695
    %v1014 = vpow.pop %v1013
    %v1015 = vadd.f32 %v1014, 1.0
    %v1016 = vrcp.pop %v1015
    %v1017 = vmul.f32 1.0, %v1016
    %v1019 = vrot.slane %v907, 6
    %v1021 = vmul.f32 %v1010, %v1019
    %v1022 = vmul.f32 %v1010, %v1011
    %1024 = vrot.lane.b32.xlu0 %v1022, 64
    %v1025 = vpop.permute.xlu0 %1024
    %v1027 = vadd.f32 %v1021, %v1025
    %v1028 = vtanh.pop %v1027
    %v1029 = vmul.f32 %v1017, %v1028
    %1031 = vrot.lane.b32.xlu0 %v1029, 64
    %v1032 = vpop.permute.xlu0 %1031
    %s1034 = scalar_lea.vmem [#allocation2], 12
    %1035 = vst.msk [vmem:[%s1034 - $0x4] sm:$0x30] %vm562, %v1032
    %1036 = vrot.lane.b32.xlu0 %v1029, 32
    %v1037 = vpop.permute.xlu0 %1036
    %s1039 = scalar_lea.vmem [#allocation3], 2
    %1040 = vst.msk [vmem:[%s1039 - $0x4] sm:$0x30] %vm562, %v1037
    %v1041 = vrot.slane %v1029, 4
    %1042 = vrot.lane.b32.xlu0 %v1041, 64
    %v1043 = vpop.permute.xlu0 %1042
    %v1044 = vsel %vm220, %v1043, 0
    %1046 = vmatprep.subr.mxu0 0.0
    %1047 = vmatpush1.msra.mxu0 0.0
    %1048 = vmatprep.subr.mxu0 0.0
    %1049 = vmatpush1.msra.mxu0 0.0
    %1050 = vmatprep.subr.mxu0 0.0
    %1051 = vmatpush1.msra.mxu0 0.0
    %1052 = vmatprep.subr.mxu0 0.0
    %1053 = vmatpush1.msra.mxu0 0.0
    %1054 = vmatprep.subr.mxu0 0.0
    %1055 = vmatpush1.msra.mxu0 0.0
    %1056 = vmatprep.subr.mxu0 0.0
    %1057 = vmatpush1.msra.mxu0 0.0
    %1058 = vmatprep.subr.mxu0 0.0
    %1059 = vmatpush1.msra.mxu0 0.0
    %1060 = vmatprep.subr.mxu0 0.0
    %1061 = vmatpush1.msra.mxu0 0.0
    %1062 = vmatprep.subr.mxu0 %v219
    %1063 = vmatpush1.msra.mxu0 %v218
    %1064 = vmatprep.subr.mxu0 %v217
    %1065 = vmatpush1.msra.mxu0 %v216
    %1066 = vmatprep.subr.mxu0 %v215
    %1067 = vmatpush1.msra.mxu0 %v214
    %1068 = vmatprep.subr.mxu0 %v213
    %1069 = vmatpush1.msra.mxu0 %v212
    %1070 = vmatprep.subr.mxu0 %v211
    %1071 = vmatpush1.msra.mxu0 %v210
    %1072 = vmatprep.subr.mxu0 %v209
    %1073 = vmatpush1.msra.mxu0 %v208
    %1074 = vmatprep.subr.mxu0 %v207
    %1075 = vmatpush1.msra.mxu0 %v206
    %1076 = vmatprep.subr.mxu0 %v205
    %1077 = vmatpush1.msra.mxu0 %v204
    %1078 = vmatprep.subr.mxu0 0.0
    %1079 = vmatpush2.msra.mxu0 0.0
    %1080 = vmatprep.subr.mxu0 0.0
    %1081 = vmatpush2.msra.mxu0 0.0
    %1082 = vmatprep.subr.mxu0 0.0
    %1083 = vmatpush2.msra.mxu0 0.0
    %1084 = vmatprep.subr.mxu0 0.0
    %1085 = vmatpush2.msra.mxu0 0.0
    %1086 = vmatprep.subr.mxu0 0.0
    %1087 = vmatpush2.msra.mxu0 0.0
    %1088 = vmatprep.subr.mxu0 0.0
    %1089 = vmatpush2.msra.mxu0 0.0
    %1090 = vmatprep.subr.mxu0 0.0
    %1091 = vmatpush2.msra.mxu0 0.0
    %1092 = vmatprep.subr.mxu0 0.0
    %1093 = vmatpush2.msra.mxu0 0.0
    %1094 = vmatprep.subr.mxu0 0.0
    %1095 = vmatpush2.msra.mxu0 0.0
    %1096 = vmatprep.subr.mxu0 0.0
    %1097 = vmatpush2.msra.mxu0 0.0
    %1098 = vmatprep.subr.mxu0 0.0
    %1099 = vmatpush2.msra.mxu0 0.0
    %1100 = vmatprep.subr.mxu0 0.0
    %1101 = vmatpush2.msra.mxu0 0.0
    %1102 = vmatprep.subr.mxu0 0.0
    %1103 = vmatpush2.msra.mxu0 0.0
    %1104 = vmatprep.subr.mxu0 0.0
    %1105 = vmatpush2.msra.mxu0 0.0
    %1106 = vmatprep.subr.mxu0 0.0
    %1107 = vmatpush2.msra.mxu0 0.0
    %1108 = vmatprep.subr.mxu0 0.0
    %1109 = vmatpush2.msra.mxu0 0.0
    %1110 = vmatprep.mubr.f32.mxu0 0.0
    %1111 = vmatmul.mubr.f32.gmra.mxu0 %v1044
    %v1112 = vpop.f32.mrf.mxu0
    %v1113 = vadd.f32 0.0, %v1112
    %v1114 = vpop.f32.mrf.mxu0
    %v1115 = vadd.f32 0.0, %v1114
    %1116 = vdwg.mxu0
    %v1119 = vrot.slane %v1113, 2
    %v1120 = vrot.slane %v1115, 2
    %v1123 = vadd.f32 %v200, %v1119
    %v1124 = vadd.f32 %v202, %v1120
    %v1125 = vxor.u32 %v1123, 2147483648
    %v1126 = vmul.f32 %v1125, 1.442695
    %v1127 = vpow.pop %v1126
    %v1128 = vadd.f32 %v1127, 1.0
    %v1129 = vrcp.pop %v1128
    %v1130 = vmul.f32 1.0, %v1129
    %v1131 = vtanh.pop %v1124
    %v1132 = vxor.u32 %v1124, 2147483648
    %v1133 = vmul.f32 %v1132, 1.442695
    %v1134 = vpow.pop %v1133
    %v1135 = vadd.f32 %v1134, 1.0
    %v1136 = vrcp.pop %v1135
    %v1137 = vmul.f32 1.0, %v1136
    %v1139 = vrot.slane %v1027, 6
    %v1141 = vmul.f32 %v1130, %v1139
    %v1142 = vmul.f32 %v1130, %v1131
    %1144 = vrot.lane.b32.xlu0 %v1142, 64
    %v1145 = vpop.permute.xlu0 %1144
    %v1147 = vadd.f32 %v1141, %v1145
    %v1148 = vtanh.pop %v1147
    %v1149 = vmul.f32 %v1137, %v1148
    %1151 = vrot.lane.b32.xlu0 %v1149, 64
    %v1152 = vpop.permute.xlu0 %1151
    %s1154 = scalar_lea.vmem [#allocation2], 14
    %1155 = vst.msk [vmem:[%s1154 - $0x6] sm:$0xc0] %vm683, %v1152
    %1156 = vrot.lane.b32.xlu0 %v1149, 32
    %v1157 = vpop.permute.xlu0 %1156
    %1159 = vst.msk [vmem:[#allocation3 - $0x6] sm:$0xc0] %vm683, %v1157
    %v1160 = vld [vmem:[#allocation2] sm:$0x3]
    %v1161 = vld [vmem:[#allocation2 + $0x2] sm:$0x3]
    %v1162 = vld [vmem:[#allocation2 + $0x4] sm:$0x3]
    %v1163 = vld [vmem:[#allocation2 + $0x6] sm:$0x3]
    %v1164 = vld [vmem:[#allocation2 + $0x8] sm:$0x3]
    %v1165 = vld [vmem:[#allocation2 + $0xa] sm:$0x3]
    %v1166 = vld [vmem:[#allocation2 + $0xc] sm:$0x3]
    %v1167 = vld [vmem:[#allocation2 + $0xe] sm:$0x3]
    %v1168 = vld [vmem:[#allocation3] sm:$0x3]
    %v1169 = vld [vmem:[#allocation3 + $0x2] sm:$0x3]
    %v1170 = vld [vmem:[#allocation3 + $0x4] sm:$0x3]
    %v1171 = vld [vmem:[#allocation3 + $0x6] sm:$0x3]
    %v1172 = vld [vmem:[#allocation3 + $0x8] sm:$0x3]
    %v1173 = vld [vmem:[#allocation3 + $0xa] sm:$0x3]
    %v1174 = vld [vmem:[#allocation3 + $0xc] sm:$0x3]
    %v1175 = vld [vmem:[#allocation3 + $0xe] sm:$0x3]
    %v1176 = vld [vmem:[%s4] sm:$0xff]
    %v1177 = vld [vmem:[%s4 + $0x8] sm:$0xff]
    %v1178 = vld [vmem:[%s4 + $0x10] sm:$0xff]
    %v1179 = vld [vmem:[%s4 + $0x18] sm:$0xff]
    %v1180 = vld [vmem:[%s4 + $0x20] sm:$0xff]
    %v1181 = vld [vmem:[%s4 + $0x28] sm:$0xff]
    %v1182 = vld [vmem:[%s4 + $0x30] sm:$0xff]
    %v1183 = vld [vmem:[%s4 + $0x38] sm:$0xff]
    %v1192 = vcombine.low %v1168, %v1169
    %v1193 = vcombine.low %v1170, %v1171
    %v1195 = vunpack.c.l.s4 1983009808
    %v1196 = vunpack.c.0.s8 %v1195
    %v1197 = vlaneseq
    %v1198 = vshrl.u32 %v1197, 7
    %v1199 = vsub.s32 %v1196, %v1198
    %v1200 = vrot.slane %v1192, %v1199
    %v1202 = vunpack.c.l.s4 1983009808
    %v1203 = vunpack.c.0.s8 %v1202
    %v1204 = vlaneseq
    %v1205 = vshrl.u32 %v1204, 7
    %v1206 = vsub.s32 %v1203, %v1205
    %v1207 = vrot.slane %v1193, %v1206
    %v1208 = vcombine.low %v1200, %v1207
    %v1209 = vcombine.low %v1172, %v1173
    %v1210 = vcombine.low %v1174, %v1175
    %v1212 = vunpack.c.l.s4 1983009808
    %v1213 = vunpack.c.0.s8 %v1212
    %v1214 = vlaneseq
    %v1215 = vshrl.u32 %v1214, 7
    %v1216 = vsub.s32 %v1213, %v1215
    %v1217 = vrot.slane %v1209, %v1216
    %v1219 = vunpack.c.l.s4 1983009808
    %v1220 = vunpack.c.0.s8 %v1219
    %v1221 = vlaneseq
    %v1222 = vshrl.u32 %v1221, 7
    %v1223 = vsub.s32 %v1220, %v1222
    %v1224 = vrot.slane %v1210, %v1223
    %v1225 = vcombine.low %v1217, %v1224
    %v1226 = vsel %vm122, %v1208, 0
    %v1228 = vsel %vm122, %v1225, 0
    %1230 = vmatprep.subr.mxu0 0.0
    %1231 = vmatpush1.msra.mxu0 0.0
    %1232 = vmatprep.subr.mxu0 0.0
    %1233 = vmatpush1.msra.mxu0 0.0
    %1234 = vmatprep.subr.mxu0 0.0
    %1235 = vmatpush1.msra.mxu0 0.0
    %1236 = vmatprep.subr.mxu0 0.0
    %1237 = vmatpush1.msra.mxu0 0.0
    %1238 = vmatprep.subr.mxu0 0.0
    %1239 = vmatpush1.msra.mxu0 0.0
    %1240 = vmatprep.subr.mxu0 0.0
    %1241 = vmatpush1.msra.mxu0 0.0
    %1242 = vmatprep.subr.mxu0 0.0
    %1243 = vmatpush1.msra.mxu0 0.0
    %1244 = vmatprep.subr.mxu0 0.0
    %1245 = vmatpush1.msra.mxu0 0.0
    %1246 = vmatprep.subr.mxu0 0.0
    %1247 = vmatpush1.msra.mxu0 0.0
    %1248 = vmatprep.subr.mxu0 0.0
    %1249 = vmatpush1.msra.mxu0 0.0
    %1250 = vmatprep.subr.mxu0 0.0
    %1251 = vmatpush1.msra.mxu0 0.0
    %1252 = vmatprep.subr.mxu0 0.0
    %1253 = vmatpush1.msra.mxu0 0.0
    %1254 = vmatprep.subr.mxu0 0.0
    %1255 = vmatpush1.msra.mxu0 %v1183
    %1256 = vmatprep.subr.mxu0 0.0
    %1257 = vmatpush1.msra.mxu0 %v1182
    %1258 = vmatprep.subr.mxu0 0.0
    %1259 = vmatpush1.msra.mxu0 %v1181
    %1260 = vmatprep.subr.mxu0 0.0
    %1261 = vmatpush1.msra.mxu0 %v1180
    %1262 = vmatprep.subr.mxu0 0.0
    %1263 = vmatpush2.msra.mxu0 0.0
    %1264 = vmatprep.subr.mxu0 0.0
    %1265 = vmatpush2.msra.mxu0 0.0
    %1266 = vmatprep.subr.mxu0 0.0
    %1267 = vmatpush2.msra.mxu0 0.0
    %1268 = vmatprep.subr.mxu0 0.0
    %1269 = vmatpush2.msra.mxu0 0.0
    %1270 = vmatprep.subr.mxu0 0.0
    %1271 = vmatpush2.msra.mxu0 0.0
    %1272 = vmatprep.subr.mxu0 0.0
    %1273 = vmatpush2.msra.mxu0 0.0
    %1274 = vmatprep.subr.mxu0 0.0
    %1275 = vmatpush2.msra.mxu0 0.0
    %1276 = vmatprep.subr.mxu0 0.0
    %1277 = vmatpush2.msra.mxu0 0.0
    %1278 = vmatprep.subr.mxu0 0.0
    %1279 = vmatpush2.msra.mxu0 0.0
    %1280 = vmatprep.subr.mxu0 0.0
    %1281 = vmatpush2.msra.mxu0 0.0
    %1282 = vmatprep.subr.mxu0 0.0
    %1283 = vmatpush2.msra.mxu0 0.0
    %1284 = vmatprep.subr.mxu0 0.0
    %1285 = vmatpush2.msra.mxu0 0.0
    %1286 = vmatprep.subr.mxu0 0.0
    %1287 = vmatpush2.msra.mxu0 0.0
    %1288 = vmatprep.subr.mxu0 0.0
    %1289 = vmatpush2.msra.mxu0 0.0
    %1290 = vmatprep.subr.mxu0 0.0
    %1291 = vmatpush2.msra.mxu0 0.0
    %1292 = vmatprep.subr.mxu0 0.0
    %1293 = vmatpush2.msra.mxu0 0.0
    %1294 = vmatprep.mubr.f32.mxu0 0.0
    %1295 = vmatmul.mubr.f32.gmra.mxu0 %v1226
    %v1296 = vpop.f32.mrf.mxu0
    %v1297 = vadd.f32 0.0, %v1296
    %v1298 = vpop.f32.mrf.mxu0
    %1299 = vmatprep.mubr.f32.mxu0 0.0
    %1300 = vmatmul.mubr.f32.gmra.mxu0 %v1228
    %v1301 = vpop.f32.mrf.mxu0
    %v1302 = vadd.f32 0.0, %v1301
    %v1303 = vpop.f32.mrf.mxu0
    %1304 = vdwg.mxu0
    %v1313 = vcombine.low %v1160, %v1161
    %v1314 = vcombine.low %v1162, %v1163
    %v1316 = vunpack.c.l.s4 1983009808
    %v1317 = vunpack.c.0.s8 %v1316
    %v1318 = vlaneseq
    %v1319 = vshrl.u32 %v1318, 7
    %v1320 = vsub.s32 %v1317, %v1319
    %v1321 = vrot.slane %v1313, %v1320
    %v1323 = vunpack.c.l.s4 1983009808
    %v1324 = vunpack.c.0.s8 %v1323
    %v1325 = vlaneseq
    %v1326 = vshrl.u32 %v1325, 7
    %v1327 = vsub.s32 %v1324, %v1326
    %v1328 = vrot.slane %v1314, %v1327
    %v1329 = vcombine.low %v1321, %v1328
    %v1330 = vcombine.low %v1164, %v1165
    %v1331 = vcombine.low %v1166, %v1167
    %v1333 = vunpack.c.l.s4 1983009808
    %v1334 = vunpack.c.0.s8 %v1333
    %v1335 = vlaneseq
    %v1336 = vshrl.u32 %v1335, 7
    %v1337 = vsub.s32 %v1334, %v1336
    %v1338 = vrot.slane %v1330, %v1337
    %v1340 = vunpack.c.l.s4 1983009808
    %v1341 = vunpack.c.0.s8 %v1340
    %v1342 = vlaneseq
    %v1343 = vshrl.u32 %v1342, 7
    %v1344 = vsub.s32 %v1341, %v1343
    %v1345 = vrot.slane %v1331, %v1344
    %v1346 = vcombine.low %v1338, %v1345
    %v1347 = vsel %vm122, %v1329, 0
    %v1349 = vsel %vm122, %v1346, 0
    %1351 = vmatprep.subr.mxu0 0.0
    %1352 = vmatpush1.msra.mxu0 0.0
    %1353 = vmatprep.subr.mxu0 0.0
    %1354 = vmatpush1.msra.mxu0 0.0
    %1355 = vmatprep.subr.mxu0 0.0
    %1356 = vmatpush1.msra.mxu0 0.0
    %1357 = vmatprep.subr.mxu0 0.0
    %1358 = vmatpush1.msra.mxu0 0.0
    %1359 = vmatprep.subr.mxu0 0.0
    %1360 = vmatpush1.msra.mxu0 0.0
    %1361 = vmatprep.subr.mxu0 0.0
    %1362 = vmatpush1.msra.mxu0 0.0
    %1363 = vmatprep.subr.mxu0 0.0
    %1364 = vmatpush1.msra.mxu0 0.0
    %1365 = vmatprep.subr.mxu0 0.0
    %1366 = vmatpush1.msra.mxu0 0.0
    %1367 = vmatprep.subr.mxu0 0.0
    %1368 = vmatpush1.msra.mxu0 0.0
    %1369 = vmatprep.subr.mxu0 0.0
    %1370 = vmatpush1.msra.mxu0 0.0
    %1371 = vmatprep.subr.mxu0 0.0
    %1372 = vmatpush1.msra.mxu0 0.0
    %1373 = vmatprep.subr.mxu0 0.0
    %1374 = vmatpush1.msra.mxu0 0.0
    %1375 = vmatprep.subr.mxu0 0.0
    %1376 = vmatpush1.msra.mxu0 %v1179
    %1377 = vmatprep.subr.mxu0 0.0
    %1378 = vmatpush1.msra.mxu0 %v1178
    %1379 = vmatprep.subr.mxu0 0.0
    %1380 = vmatpush1.msra.mxu0 %v1177
    %1381 = vmatprep.subr.mxu0 0.0
    %1382 = vmatpush1.msra.mxu0 %v1176
    %1383 = vmatprep.subr.mxu0 0.0
    %1384 = vmatpush2.msra.mxu0 0.0
    %1385 = vmatprep.subr.mxu0 0.0
    %1386 = vmatpush2.msra.mxu0 0.0
    %1387 = vmatprep.subr.mxu0 0.0
    %1388 = vmatpush2.msra.mxu0 0.0
    %1389 = vmatprep.subr.mxu0 0.0
    %1390 = vmatpush2.msra.mxu0 0.0
    %1391 = vmatprep.subr.mxu0 0.0
    %1392 = vmatpush2.msra.mxu0 0.0
    %1393 = vmatprep.subr.mxu0 0.0
    %1394 = vmatpush2.msra.mxu0 0.0
    %1395 = vmatprep.subr.mxu0 0.0
    %1396 = vmatpush2.msra.mxu0 0.0
    %1397 = vmatprep.subr.mxu0 0.0
    %1398 = vmatpush2.msra.mxu0 0.0
    %1399 = vmatprep.subr.mxu0 0.0
    %1400 = vmatpush2.msra.mxu0 0.0
    %1401 = vmatprep.subr.mxu0 0.0
    %1402 = vmatpush2.msra.mxu0 0.0
    %1403 = vmatprep.subr.mxu0 0.0
    %1404 = vmatpush2.msra.mxu0 0.0
    %1405 = vmatprep.subr.mxu0 0.0
    %1406 = vmatpush2.msra.mxu0 0.0
    %1407 = vmatprep.subr.mxu0 0.0
    %1408 = vmatpush2.msra.mxu0 0.0
    %1409 = vmatprep.subr.mxu0 0.0
    %1410 = vmatpush2.msra.mxu0 0.0
    %1411 = vmatprep.subr.mxu0 0.0
    %1412 = vmatpush2.msra.mxu0 0.0
    %1413 = vmatprep.subr.mxu0 0.0
    %1414 = vmatpush2.msra.mxu0 0.0
    %1415 = vmatprep.mubr.f32.mxu0 0.0
    %1416 = vmatmul.mubr.f32.gmra.mxu0 %v1347
    %v1417 = vpop.f32.mrf.mxu0
    %v1418 = vadd.f32 %v1297, %v1417
    %v1419 = vpop.f32.mrf.mxu0
    %1420 = vmatprep.mubr.f32.mxu0 0.0
    %1421 = vmatmul.mubr.f32.gmra.mxu0 %v1349
    %v1422 = vpop.f32.mrf.mxu0
    %v1423 = vadd.f32 %v1302, %v1422
    %v1424 = vpop.f32.mrf.mxu0
    %1425 = vdwg.mxu0
    %v1426 = vld [vmem:[%s5] sm:$0x1]
    %v1428 = vlaneseq
    %v1429 = vshrl.u32 %v1428, 7
    %v1430 = vsub.s32 0, %v1429
    %v1431 = vrot.slane %v1426, %v1430
    %v1433 = vadd.f32 %v1418, %v1431
    %v1434 = vadd.f32 %v1423, %v1431
    %v1437 = vcombine.high %v1433, %v1433
    %v1439 = vunpack.c.l.s4 1983009808
    %v1440 = vunpack.c.0.s8 %v1439
    %v1441 = vlaneseq
    %v1442 = vshrl.u32 %v1441, 7
    %v1443 = vsub.s32 %v1440, %v1442
    %v1444 = vrot.slane %v1433, %v1443
    %v1446 = vunpack.c.l.s4 1983009808
    %v1447 = vunpack.c.0.s8 %v1446
    %v1448 = vlaneseq
    %v1449 = vshrl.u32 %v1448, 7
    %v1450 = vsub.s32 %v1447, %v1449
    %v1451 = vrot.slane %v1437, %v1450
    %v1452 = vcombine.high %v1444, %v1444
    %v1453 = vcombine.high %v1451, %v1451
    %v1454 = vcombine.high %v1434, %v1434
    %v1456 = vunpack.c.l.s4 1983009808
    %v1457 = vunpack.c.0.s8 %v1456
    %v1458 = vlaneseq
    %v1459 = vshrl.u32 %v1458, 7
    %v1460 = vsub.s32 %v1457, %v1459
    %v1461 = vrot.slane %v1434, %v1460
    %v1463 = vunpack.c.l.s4 1983009808
    %v1464 = vunpack.c.0.s8 %v1463
    %v1465 = vlaneseq
    %v1466 = vshrl.u32 %v1465, 7
    %v1467 = vsub.s32 %v1464, %v1466
    %v1468 = vrot.slane %v1454, %v1467
    %v1469 = vcombine.high %v1461, %v1461
    %v1470 = vcombine.high %v1468, %v1468
    %vm1479 = vcmask 58368
    %1480 = vst.msk [vmem:[#allocation9] sm:$0x3] %vm1479, %v1444
    %1481 = vst.msk [vmem:[#allocation9 + $0x2] sm:$0x3] %vm1479, %v1452
    %1482 = vst.msk [vmem:[#allocation9 + $0x4] sm:$0x3] %vm1479, %v1451
    %1483 = vst.msk [vmem:[#allocation9 + $0x6] sm:$0x3] %vm1479, %v1453
    %1484 = vst.msk [vmem:[#allocation9 + $0x8] sm:$0x3] %vm1479, %v1461
    %1485 = vst.msk [vmem:[#allocation9 + $0xa] sm:$0x3] %vm1479, %v1469
    %1486 = vst.msk [vmem:[#allocation9 + $0xc] sm:$0x3] %vm1479, %v1468
    %1487 = vst.msk [vmem:[#allocation9 + $0xe] sm:$0x3] %vm1479, %v1470
    // Predicated region
    $region34: #{tpu_custom_call.1} parent=1 // pred_check
      _
    $region35: #{tpu_custom_call.1} parent=1 // pred_check_branch
      %1489 = sbr.rel (0) target = $region37
    $region36: #{tpu_custom_call.1} parent=1 // pred_region
      %s1491 = ssub.s32 256, 256
      %1492 = vsyncadd [#allocation6], %s1491
      %s1493 = sshll.u32 [#allocation9], 4
      %s1494 = int_to_ptr.vmem [resolvable:$true] %s1493
      %1499 = dma.vmem_to_hbm [thread:$0]  %s1494, 256, %s6, [#allocation6], 32, 32, 2
    $region37: #{tpu_custom_call.1} parent=1 // pred_fallthru
      _
    // Predicated region
    $region38: #{tpu_custom_call.1} parent=1 // pred_check
      _
    $region39: #{tpu_custom_call.1} parent=1 // pred_check_branch
      %1501 = sbr.rel (0) target = $region41
    $region40: #{tpu_custom_call.1} parent=1 // pred_region
      %1502 = dma.done [#allocation6], 256
    $region41: #{tpu_custom_call.1} parent=1 // pred_fallthru
      _
    %1503 = vsyncpa [#allocation5], 1
    %1504 = vsyncpa [#allocation8], 1
    %1505 = vsyncpa [#allocation6], 1

</llo_original>
